<compile_context>
chip_gen: v7x
topology: tpu7x:2x2x1
jax: 0.10.0
libtpu: 0.0.40
codegen_flags: <defaults>
</compile_context>

<pallas_src>
import functools
import math

import jax
import jax.numpy as jnp
from jax import lax
from jax.experimental import pallas as pl
from jax.experimental.pallas import tpu as pltpu

EPS = 1e-5


# ----------------------------------------------------------------------------
# Sizing helpers.
# ----------------------------------------------------------------------------
def _round_up(x, m):
    return (x + m - 1) // m * m


def _vmem_budget():
    """(vmem_limit_bytes, per-block working-set budget), per generation."""
    cap = 64 * 1024 * 1024                       # conservative default (v7x: 64 MiB/TC)
    try:
        cap = int(pltpu.get_tpu_info().vmem_capacity_bytes)
    except Exception:
        pass
    limit = min((cap * 3) // 4, 96 * 1024 * 1024)   # ~48 MiB on v7x, larger on 128 MiB parts
    return limit, limit // 3


def _pick_frames(NT, H, bytes_per_frame, block_budget, row_align=16, max_frames=256):
    """Frames per grid step.

    Rows per block (F*H) stay a multiple of `row_align` (bf16 sublane tiles),
    F is capped so the grid has >=2 (ideally >=4) steps (v7x megacore), and the
    double-buffered working set stays under `block_budget`.  F does not need to
    divide NT: the tail block is zero padded and masked out of the statistics.
    """
    base = max(1, row_align // math.gcd(H, row_align))   # smallest aligned frame count
    if NT >= 4 * base:
        cap = NT // 4
    elif NT >= 2 * base:
        cap = NT // 2
    else:
        cap = max(NT, base)
    cap = min(cap, max_frames)
    F = max(base, (cap // base) * base)
    while F > base and F * bytes_per_frame > block_budget:
        F -= base
    G = -(-NT // F)
    return F, G


def _banded_weight(w, W):
    """HWIO (KH, KW, Cin, Cout) -> (KH*W*Cin, W*Cout) banded matrix.

    A row-shifted (rows, W*Cin) activation slab times this matrix performs all
    KW taps *and* the zero padding along W in one MXU contraction:
      band[kh*W*Cin + wi*Cin + ci, wo*Cout + co] = w[kh, wi-wo+pad, ci, co]
    (zero when wi-wo+pad is outside [0, KW)).
    """
    KH, KW, Cin, Cout = w.shape
    padw = KW // 2
    wi = jnp.arange(W)[:, None]
    wo = jnp.arange(W)[None, :]
    k = wi - wo + padw
    valid = (k >= 0) & (k < KW)
    wk = w[:, jnp.clip(k, 0, KW - 1)]                       # (KH, W, W, Cin, Cout)
    wk = jnp.where(valid[None, :, :, None, None], wk, 0.0)
    return jnp.transpose(wk, (0, 1, 3, 2, 4)).reshape(KH * W * Cin, W * Cout)


# ----------------------------------------------------------------------------
# Kernel 1: per-frame-block 2D conv as one banded im2col matmul (bf16 operands,
#           f32 accumulation), optional fused input BN+ReLU, and per-block
#           partial sums for the output's BatchNorm statistics.
# ----------------------------------------------------------------------------
def _conv_kernel(*refs, H, KH, pad, F, NT, fuse_input, ragged):
    if fuse_input:
        x_ref, w_ref, scale_ref, shift_ref, y_ref, sum_ref, sq_ref = refs
    else:
        x_ref, w_ref, y_ref, sum_ref, sq_ref = refs

    FH, WC = x_ref.shape

    x = x_ref[...].astype(jnp.float32)                       # (FH, W*Cin)
    if fuse_input:
        # Fused BN(scale/shift) + ReLU of the previous conv's output (VPU work,
        # hidden under the MXU).  Conv zero padding is applied *after* this, so
        # the padded halo is exactly zero, matching PyTorch.
        x = jnp.maximum(x * scale_ref[...] + shift_ref[...], 0.0)

    # KH row-shifted copies via pltpu.roll (XLU) + per-frame masks (VPU).  The
    # KW taps / W-padding live in the banded weight, so there are no lane
    # shifts, no halo scratch, and no sublane-misaligned slices.
    rowf = lax.broadcasted_iota(jnp.int32, (FH, WC), 0) % H
    pieces = []
    for kh in range(KH):
        s = kh - pad
        if s == 0:
            pieces.append(x)
        else:
            shifted = pltpu.roll(x, (-s) % FH, 0)
            ok = (rowf + s >= 0) & (rowf + s < H)             # zero outside the frame
            pieces.append(jnp.where(ok, shifted, 0.0))
    p = jnp.concatenate(pieces, axis=1).astype(jnp.bfloat16)  # (FH, KH*W*Cin)

    # Single im2col-style matmul: contraction KH*W*Cin, lane-dense W*Cout out.
    acc = jnp.dot(p, w_ref[...], preferred_element_type=jnp.float32)   # (FH, W*Cout) f32
    y_ref[...] = acc.astype(y_ref.dtype)

    # Per-block partial sums for training-mode BatchNorm, from the f32
    # accumulator.  (E[x^2]-E[x]^2 in f32 is fine at these scales; switch to
    # Welford-style partials before scaling NT*H*W up by orders of magnitude.)
    if ragged:
        g = pl.program_id(0)
        thresh = jnp.clip((NT - g * F) * H, 0, FH)            # valid rows in this block
        rows = lax.broadcasted_iota(jnp.int32, acc.shape, 0)
        acc_m = jnp.where(rows < thresh, acc, 0.0)
    else:
        acc_m = acc
    sum_ref[...] = jnp.sum(acc_m, axis=0)[None, None, :]
    sq_ref[...] = jnp.sum(acc_m * acc_m, axis=0)[None, None, :]


def conv_frames(x2d, wband, *, H, KH, pad, NT, F, G, vmem_limit,
                in_scale=None, in_shift=None, out_dtype=jnp.bfloat16):
    """x2d: (G*F*H, W*Cin); wband: (KH*W*Cin, W*Cout) bf16.

    Returns (y, psum, psq): y (G*F*H, W*Cout) in out_dtype, and per-block
    partial sum / sum-of-squares of the conv output, shape (G, 1, W*Cout) f32.
    If in_scale/in_shift are given, relu(x*scale + shift) is applied to the
    input inside the kernel before the convolution (fused BN+ReLU).
    """
    rows, WCin = x2d.shape
    WCout = wband.shape[1]
    FH = F * H
    fuse = in_scale is not None
    ragged = (G * F != NT)

    kernel = functools.partial(_conv_kernel, H=H, KH=KH, pad=pad, F=F, NT=NT,
                               fuse_input=fuse, ragged=ragged)

    in_specs = [pl.BlockSpec((FH, WCin), lambda g: (g, 0)),
                pl.BlockSpec(wband.shape, lambda g: (0, 0))]
    args = [x2d, wband]
    if fuse:
        in_specs += [pl.BlockSpec((1, WCin), lambda g: (0, 0)),
                     pl.BlockSpec((1, WCin), lambda g: (0, 0))]
        args += [in_scale, in_shift]

    out_shape = (jax.ShapeDtypeStruct((rows, WCout), out_dtype),
                 jax.ShapeDtypeStruct((G, 1, WCout), jnp.float32),
                 jax.ShapeDtypeStruct((G, 1, WCout), jnp.float32))
    out_specs = (pl.BlockSpec((FH, WCout), lambda g: (g, 0)),
                 pl.BlockSpec((1, 1, WCout), lambda g: (g, 0, 0)),
                 pl.BlockSpec((1, 1, WCout), lambda g: (g, 0, 0)))

    return pl.pallas_call(
        kernel,
        out_shape=out_shape,
        grid=(G,),
        in_specs=in_specs,
        out_specs=out_specs,
        compiler_params=pltpu.CompilerParams(
            dimension_semantics=("parallel",),
            vmem_limit_bytes=vmem_limit),
    )(*args)


# ----------------------------------------------------------------------------
# Kernel 2: fused residual add + BatchNorm2 + ReLU in the same (rows, W*C)
#           layout:  out = relu(x + y*scale + shift).
# ----------------------------------------------------------------------------
def _residual_bn_relu_kernel(x_ref, y_ref, scale_ref, shift_ref, o_ref):
    y = y_ref[...].astype(jnp.float32)
    o_ref[...] = jnp.maximum(x_ref[...] + y * scale_ref[...] + shift_ref[...], 0.0)


def residual_bn_relu(x2d, y2d, scale_row, shift_row, *, H, F, G, vmem_limit):
    rows, WC = x2d.shape
    FH = F * H
    return pl.pallas_call(
        _residual_bn_relu_kernel,
        out_shape=jax.ShapeDtypeStruct((rows, WC), jnp.float32),
        grid=(G,),
        in_specs=[pl.BlockSpec((FH, WC), lambda g: (g, 0)),
                  pl.BlockSpec((FH, WC), lambda g: (g, 0)),
                  pl.BlockSpec((1, WC), lambda g: (0, 0)),
                  pl.BlockSpec((1, WC), lambda g: (0, 0))],
        out_specs=pl.BlockSpec((FH, WC), lambda g: (g, 0)),
        compiler_params=pltpu.CompilerParams(
            dimension_semantics=("parallel",),
            vmem_limit_bytes=vmem_limit),
    )(x2d, y2d, scale_row, shift_row)


# ----------------------------------------------------------------------------
# Parallel2DBlock forward (downsample=False).
# ----------------------------------------------------------------------------
def parallel2d_block_forward(x, params):
    """x: (N, C, T, H, W) float32 (PyTorch NCDHW)."""
    w1, _b1, g1, beta1, w2, _b2, g2, beta2 = params
    # Conv biases (_b1, _b2) cancel exactly under training-mode BatchNorm.
    N, Cin, T, H, W = x.shape
    KH = w1.shape[0]
    pad = KH // 2
    Cout = w1.shape[-1]
    assert Cin == Cout, "residual path requires Cin == Cout (downsample=False)"

    NT = N * T
    WCi = W * Cin
    WCo = W * Cout

    vmem_limit, budget = _vmem_budget()

    # Frame blocking: one conv tile = F frames = F*H rows of the (rows, W*C) slab.
    lane_i = _round_up(WCi, 128)
    lane_o = _round_up(WCo, 128)
    bytes_per_frame = H * (2 * 4 * lane_i      # f32 input block, double-buffered
                           + 2 * 2 * lane_o    # bf16 output block, double-buffered
                           + 2 * KH * lane_i   # bf16 im2col slab
                           + 4 * lane_o)       # f32 accumulator temp
    F, G = _pick_frames(NT, H, bytes_per_frame, budget)
    NTp = F * G

    # NCDHW -> frame-major rows, channels merged into the lane axis: (NT*H, W*C)
    xf = jnp.transpose(x, (0, 2, 3, 4, 1)).reshape(NT * H, WCi)
    if NTp != NT:
        xf = jnp.pad(xf, ((0, (NTp - NT) * H), (0, 0)))       # tail frames masked in-kernel

    cnt = float(NT * H * W)

    # Banded bf16 weights (KW taps + zero padding along W folded in).
    wb1 = _banded_weight(w1, W).astype(jnp.bfloat16)
    wb2 = _banded_weight(w2, W).astype(jnp.bfloat16)

    # conv1 (+ BN1 partial statistics in-kernel); y1 stored bf16.
    y1, s1, q1 = conv_frames(xf, wb1, H=H, KH=KH, pad=pad, NT=NT, F=F, G=G,
                             vmem_limit=vmem_limit)
    s1t = jnp.sum(s1, axis=(0, 1)).reshape(W, Cout).sum(axis=0)
    q1t = jnp.sum(q1, axis=(0, 1)).reshape(W, Cout).sum(axis=0)
    mean1 = s1t / cnt
    var1 = q1t / cnt - mean1 * mean1
    scale1 = g1 * lax.rsqrt(var1 + EPS)
    shift1 = beta1 - mean1 * scale1

    # conv2 with BN1+ReLU1 fused on its input (+ BN2 partial stats); y2 bf16.
    scale1_row = jnp.tile(scale1, W).reshape(1, WCo)
    shift1_row = jnp.tile(shift1, W).reshape(1, WCo)
    y2, s2, q2 = conv_frames(y1, wb2, H=H, KH=KH, pad=pad, NT=NT, F=F, G=G,
                             in_scale=scale1_row, in_shift=shift1_row,
                             vmem_limit=vmem_limit)
    s2t = jnp.sum(s2, axis=(0, 1)).reshape(W, Cout).sum(axis=0)
    q2t = jnp.sum(q2, axis=(0, 1)).reshape(W, Cout).sum(axis=0)
    mean2 = s2t / cnt
    var2 = q2t / cnt - mean2 * mean2
    scale2 = g2 * lax.rsqrt(var2 + EPS)
    shift2 = beta2 - mean2 * scale2

    # out = relu(x + bn2(y2)) in the same (rows, W*C) layout (no relayout).
    out2d = residual_bn_relu(
        xf, y2,
        jnp.tile(scale2, W).reshape(1, WCo),
        jnp.tile(shift2, W).reshape(1, WCo),
        H=H, F=F, G=G, vmem_limit=vmem_limit)

    out2d = out2d[: NT * H]                                   # drop padded tail frames
    return jnp.transpose(out2d.reshape(N, T, H, W, Cout), (0, 4, 1, 2, 3))


# ----------------------------------------------------------------------------
# Pure-JAX reference (same math, XLA convs) for a correctness check.
# ----------------------------------------------------------------------------
def _ref_forward(x, params):
    w1, b1, g1, beta1, w2, b2, g2, beta2 = params
    N, Cin, T, H, W = x.shape
    pad = w1.shape[0] // 2
    xf = jnp.transpose(x, (0, 2, 3, 4, 1)).reshape(N * T, H, W, Cin)

    def conv(z, w, b):
        return jax.lax.conv_general_dilated(
            z, w, (1, 1), [(pad, pad), (pad, pad)],
            dimension_numbers=("NHWC", "HWIO", "NHWC")) + b

    def bn(z, g, beta):
        m = jnp.mean(z, axis=(0, 1, 2))
        v = jnp.var(z, axis=(0, 1, 2))
        return (z - m) / jnp.sqrt(v + EPS) * g + beta

    r = jax.nn.relu(bn(conv(xf, w1, b1), g1, beta1))
    r = bn(conv(r, w2, b2), g2, beta2)
    out_f = jax.nn.relu(xf + r)
    return jnp.transpose(out_f.reshape(N, T, H, W, -1), (0, 4, 1, 2, 3))


if __name__ == "__main__":
    # Small shapes: N=2 batch, C=8 channels, T=3 frames, 8x8 spatial, k=3.
    N, C, T, H, W = 2, 8, 3, 8, 8
    K = 3

    key = jax.random.PRNGKey(0)
    k0, k1, k2, k3, k4, k5, k6, k7, k8 = jax.random.split(key, 9)

    x = jax.random.normal(k0, (N, C, T, H, W), dtype=jnp.float32)

    # Deterministic synthetic parameters (conv weights in HWIO layout).
    w1 = 0.1 * jax.random.normal(k1, (K, K, C, C), dtype=jnp.float32)
    b1 = 0.1 * jax.random.normal(k2, (C,), dtype=jnp.float32)
    g1 = 1.0 + 0.1 * jax.random.normal(k3, (C,), dtype=jnp.float32)
    beta1 = 0.1 * jax.random.normal(k4, (C,), dtype=jnp.float32)
    w2 = 0.1 * jax.random.normal(k5, (K, K, C, C), dtype=jnp.float32)
    b2 = 0.1 * jax.random.normal(k6, (C,), dtype=jnp.float32)
    g2 = 1.0 + 0.1 * jax.random.normal(k7, (C,), dtype=jnp.float32)
    beta2 = 0.1 * jax.random.normal(k8, (C,), dtype=jnp.float32)

    params = (w1, b1, g1, beta1, w2, b2, g2, beta2)

    fwd = jax.jit(parallel2d_block_forward)
    out = jax.block_until_ready(fwd(x, params))

    ref = jax.block_until_ready(_ref_forward(x, params))
    max_err = float(jnp.max(jnp.abs(out - ref)))
    assert out.shape == (N, C, T, H, W)
    # bf16 MXU operands and bf16 y1/y2 intermediates -> compare with a bf16 tolerance.
    assert max_err < 5e-2, f"mismatch vs reference: {max_err}"

    print("KERNEL_OK")
</pallas_src>

<mosaic_0001>
module attributes {stable_mosaic.version = 11 : i64} {
  func.func @_conv_kernel(%arg0: i32, %arg1: memref<16x64xf32, #tpu.memory_space<vmem>>, %arg2: memref<192x64xbf16, #tpu.memory_space<vmem>>, %arg3: memref<16x64xbf16, #tpu.memory_space<vmem>>, %arg4: memref<1x1x64xf32, #tpu.memory_space<vmem>>, %arg5: memref<1x1x64xf32, #tpu.memory_space<vmem>>) attributes {dimension_semantics = [#tpu.dimension_semantics<parallel>], iteration_bounds = array<i64: 3>, scalar_prefetch = 0 : i64, scratch_operands = 0 : i64, tpu.core_type = #tpu.core_type<tc>, window_params = [{transform_indices = @transform_0, window_bounds = array<i64: 16, 64>}, {pipeline_mode = #tpu.pipeline_mode<synchronous>, transform_indices = @transform_1, window_bounds = array<i64: 192, 64>}, {transform_indices = @transform_2, window_bounds = array<i64: 16, 64>}, {transform_indices = @transform_3, window_bounds = array<i64: 1, 1, 64>}, {transform_indices = @transform_4, window_bounds = array<i64: 1, 1, 64>}]} {
    %c0 = arith.constant 0 : index
    %c0_0 = arith.constant 0 : index
    %0 = vector.load %arg1[%c0, %c0_0] : memref<16x64xf32, #tpu.memory_space<vmem>>, vector<16x64xf32>
    %1 = tpu.iota {dimensions = array<i32: 0>} : vector<16x64xi32>
    %c8_i32 = arith.constant 8 : i32
    %c0_i32 = arith.constant 0 : i32
    %2 = arith.cmpi eq, %c8_i32, %c0_i32 : i32
    %c1_i32 = arith.constant 1 : i32
    %3 = arith.select %2, %c1_i32, %c8_i32 : i32
    %4 = vector.broadcast %3 : i32 to vector<16x64xi32>
    %5 = arith.remsi %1, %4 : vector<16x64xi32>
    %c0_i32_1 = arith.constant 0 : i32
    %6 = vector.broadcast %c0_i32_1 : i32 to vector<16x64xi32>
    %7 = arith.cmpi ne, %5, %6 : vector<16x64xi32>
    %c0_i32_2 = arith.constant 0 : i32
    %8 = vector.broadcast %c0_i32_2 : i32 to vector<16x64xi32>
    %9 = arith.cmpi slt, %5, %8 : vector<16x64xi32>
    %c0_i32_3 = arith.constant 0 : i32
    %10 = arith.cmpi slt, %3, %c0_i32_3 : i32
    %11 = vector.broadcast %10 : i1 to vector<16x64xi1>
    %12 = vector.broadcast %11 : vector<16x64xi1> to vector<16x64xi1>
    %13 = arith.xori %9, %12 : vector<16x64xi1>
    %14 = arith.andi %13, %7 : vector<16x64xi1>
    %15 = vector.broadcast %3 : i32 to vector<16x64xi32>
    %16 = arith.addi %5, %15 : vector<16x64xi32>
    %17 = arith.select %14, %16, %5 : vector<16x64xi1>, vector<16x64xi32>
    %c1_i32_4 = arith.constant 1 : i32
    %18 = tpu.dynamic_rotate %0 by %c1_i32_4 dim 0 : vector<16x64xf32>, i32 -> vector<16x64xf32>
    %c-1_i32 = arith.constant -1 : i32
    %19 = vector.broadcast %c-1_i32 : i32 to vector<16x64xi32>
    %20 = arith.addi %17, %19 : vector<16x64xi32>
    %c0_i32_5 = arith.constant 0 : i32
    %21 = vector.broadcast %c0_i32_5 : i32 to vector<16x64xi32>
    %22 = arith.cmpi sge, %20, %21 : vector<16x64xi32>
    %c-1_i32_6 = arith.constant -1 : i32
    %23 = vector.broadcast %c-1_i32_6 : i32 to vector<16x64xi32>
    %24 = arith.addi %17, %23 : vector<16x64xi32>
    %c8_i32_7 = arith.constant 8 : i32
    %25 = vector.broadcast %c8_i32_7 : i32 to vector<16x64xi32>
    %26 = arith.cmpi slt, %24, %25 : vector<16x64xi32>
    %27 = arith.andi %22, %26 : vector<16x64xi1>
    %cst = arith.constant 0.000000e+00 : f32
    %28 = vector.broadcast %cst : f32 to vector<16x64xf32>
    %29 = arith.select %27, %18, %28 : vector<16x64xi1>, vector<16x64xf32>
    %c15_i32 = arith.constant 15 : i32
    %30 = tpu.dynamic_rotate %0 by %c15_i32 dim 0 : vector<16x64xf32>, i32 -> vector<16x64xf32>
    %c1_i32_8 = arith.constant 1 : i32
    %31 = vector.broadcast %c1_i32_8 : i32 to vector<16x64xi32>
    %32 = arith.addi %17, %31 : vector<16x64xi32>
    %c0_i32_9 = arith.constant 0 : i32
    %33 = vector.broadcast %c0_i32_9 : i32 to vector<16x64xi32>
    %34 = arith.cmpi sge, %32, %33 : vector<16x64xi32>
    %c1_i32_10 = arith.constant 1 : i32
    %35 = vector.broadcast %c1_i32_10 : i32 to vector<16x64xi32>
    %36 = arith.addi %17, %35 : vector<16x64xi32>
    %c8_i32_11 = arith.constant 8 : i32
    %37 = vector.broadcast %c8_i32_11 : i32 to vector<16x64xi32>
    %38 = arith.cmpi slt, %36, %37 : vector<16x64xi32>
    %39 = arith.andi %34, %38 : vector<16x64xi1>
    %cst_12 = arith.constant 0.000000e+00 : f32
    %40 = vector.broadcast %cst_12 : f32 to vector<16x64xf32>
    %41 = arith.select %39, %30, %40 : vector<16x64xi1>, vector<16x64xf32>
    %42 = tpu.concatenate %29, %0, %41 in 1 : vector<16x64xf32>, vector<16x64xf32>, vector<16x64xf32> -> vector<16x192xf32>
    %43 = arith.truncf %42 : vector<16x192xf32> to vector<16x192xbf16>
    %c0_13 = arith.constant 0 : index
    %c0_14 = arith.constant 0 : index
    %44 = vector.load %arg2[%c0_13, %c0_14] : memref<192x64xbf16, #tpu.memory_space<vmem>>, vector<192x64xbf16>
    %cst_15 = arith.constant dense<0.000000e+00> : vector<16x64xf32>
    %45 = tpu.matmul %43, %44, %cst_15 {dimension_numbers = #tpu.dot_dimension_numbers<[1], [0], [0], [1], [0, 0, 1, 1], [], []>} : vector<16x192xbf16>, vector<192x64xbf16>, vector<16x64xf32> -> vector<16x64xf32>
    %46 = arith.truncf %45 : vector<16x64xf32> to vector<16x64xbf16>
    %c0_16 = arith.constant 0 : index
    %c0_17 = arith.constant 0 : index
    %47 = vector.load %arg3[%c0_16, %c0_17] : memref<16x64xbf16, #tpu.memory_space<vmem>>, vector<16x64xbf16>
    tpu.vector_store %arg3[%c0_16, %c0_17], %46 {strides = array<i32>} : memref<16x64xbf16, #tpu.memory_space<vmem>>, vector<16x64xbf16>,
    %cst_18 = arith.constant dense<0.000000e+00> : vector<64xf32>
    %48 = vector.multi_reduction <add>, %45, %cst_18 [0] : vector<16x64xf32> to vector<64xf32>
    %49 = vector.shape_cast %48 : vector<64xf32> to vector<1x1x64xf32>
    %c0_19 = arith.constant 0 : index
    %c0_20 = arith.constant 0 : index
    %c0_21 = arith.constant 0 : index
    %50 = vector.load %arg4[%c0_19, %c0_20, %c0_21] : memref<1x1x64xf32, #tpu.memory_space<vmem>>, vector<1x1x64xf32>
    tpu.vector_store %arg4[%c0_19, %c0_20, %c0_21], %49 {strides = array<i32>} : memref<1x1x64xf32, #tpu.memory_space<vmem>>, vector<1x1x64xf32>,
    %51 = arith.mulf %45, %45 : vector<16x64xf32>
    %cst_22 = arith.constant dense<0.000000e+00> : vector<64xf32>
    %52 = vector.multi_reduction <add>, %51, %cst_22 [0] : vector<16x64xf32> to vector<64xf32>
    %53 = vector.shape_cast %52 : vector<64xf32> to vector<1x1x64xf32>
    %c0_23 = arith.constant 0 : index
    %c0_24 = arith.constant 0 : index
    %c0_25 = arith.constant 0 : index
    %54 = vector.load %arg5[%c0_23, %c0_24, %c0_25] : memref<1x1x64xf32, #tpu.memory_space<vmem>>, vector<1x1x64xf32>
    tpu.vector_store %arg5[%c0_23, %c0_24, %c0_25], %53 {strides = array<i32>} : memref<1x1x64xf32, #tpu.memory_space<vmem>>, vector<1x1x64xf32>,
    return
  }
  func.func @transform_0(%arg0: i32) -> (i32, i32) {
    %c0_i32 = arith.constant 0 : i32
    %c0_i32_0 = arith.constant 0 : i32
    return %arg0, %c0_i32 : i32, i32
  }
  func.func @transform_1(%arg0: i32) -> (i32, i32) {
    %c0_i32 = arith.constant 0 : i32
    %c0_i32_0 = arith.constant 0 : i32
    %c0_i32_1 = arith.constant 0 : i32
    return %c0_i32, %c0_i32_0 : i32, i32
  }
  func.func @transform_2(%arg0: i32) -> (i32, i32) {
    %c0_i32 = arith.constant 0 : i32
    %c0_i32_0 = arith.constant 0 : i32
    return %arg0, %c0_i32 : i32, i32
  }
  func.func @transform_3(%arg0: i32) -> (i32, i32, i32) {
    %c0_i32 = arith.constant 0 : i32
    %c0_i32_0 = arith.constant 0 : i32
    %c0_i32_1 = arith.constant 0 : i32
    return %arg0, %c0_i32, %c0_i32_0 : i32, i32, i32
  }
  func.func @transform_4(%arg0: i32) -> (i32, i32, i32) {
    %c0_i32 = arith.constant 0 : i32
    %c0_i32_0 = arith.constant 0 : i32
    %c0_i32_1 = arith.constant 0 : i32
    return %arg0, %c0_i32, %c0_i32_0 : i32, i32, i32
  }
}

module attributes {stable_mosaic.version = 11 : i64} {
  func.func @_conv_kernel(%arg0: i32, %arg1: memref<16x64xbf16, #tpu.memory_space<vmem>>, %arg2: memref<192x64xbf16, #tpu.memory_space<vmem>>, %arg3: memref<1x64xf32, #tpu.memory_space<vmem>>, %arg4: memref<1x64xf32, #tpu.memory_space<vmem>>, %arg5: memref<16x64xbf16, #tpu.memory_space<vmem>>, %arg6: memref<1x1x64xf32, #tpu.memory_space<vmem>>, %arg7: memref<1x1x64xf32, #tpu.memory_space<vmem>>) attributes {dimension_semantics = [#tpu.dimension_semantics<parallel>], iteration_bounds = array<i64: 3>, scalar_prefetch = 0 : i64, scratch_operands = 0 : i64, tpu.core_type = #tpu.core_type<tc>, window_params = [{transform_indices = @transform_0, window_bounds = array<i64: 16, 64>}, {pipeline_mode = #tpu.pipeline_mode<synchronous>, transform_indices = @transform_1, window_bounds = array<i64: 192, 64>}, {pipeline_mode = #tpu.pipeline_mode<synchronous>, transform_indices = @transform_2, window_bounds = array<i64: 1, 64>}, {pipeline_mode = #tpu.pipeline_mode<synchronous>, transform_indices = @transform_3, window_bounds = array<i64: 1, 64>}, {transform_indices = @transform_4, window_bounds = array<i64: 16, 64>}, {transform_indices = @transform_5, window_bounds = array<i64: 1, 1, 64>}, {transform_indices = @transform_6, window_bounds = array<i64: 1, 1, 64>}]} {
    %c0 = arith.constant 0 : index
    %c0_0 = arith.constant 0 : index
    %0 = vector.load %arg1[%c0, %c0_0] : memref<16x64xbf16, #tpu.memory_space<vmem>>, vector<16x64xbf16>
    %1 = arith.extf %0 : vector<16x64xbf16> to vector<16x64xf32>
    %c0_1 = arith.constant 0 : index
    %c0_2 = arith.constant 0 : index
    %2 = vector.load %arg3[%c0_1, %c0_2] : memref<1x64xf32, #tpu.memory_space<vmem>>, vector<1x64xf32>
    %3 = vector.broadcast %2 : vector<1x64xf32> to vector<16x64xf32>
    %4 = arith.mulf %1, %3 : vector<16x64xf32>
    %c0_3 = arith.constant 0 : index
    %c0_4 = arith.constant 0 : index
    %5 = vector.load %arg4[%c0_3, %c0_4] : memref<1x64xf32, #tpu.memory_space<vmem>>, vector<1x64xf32>
    %6 = vector.broadcast %5 : vector<1x64xf32> to vector<16x64xf32>
    %7 = arith.addf %4, %6 : vector<16x64xf32>
    %cst = arith.constant 0.000000e+00 : f32
    %8 = vector.broadcast %cst : f32 to vector<16x64xf32>
    %9 = arith.maximumf %7, %8 : vector<16x64xf32>
    %10 = tpu.iota {dimensions = array<i32: 0>} : vector<16x64xi32>
    %c8_i32 = arith.constant 8 : i32
    %c0_i32 = arith.constant 0 : i32
    %11 = arith.cmpi eq, %c8_i32, %c0_i32 : i32
    %c1_i32 = arith.constant 1 : i32
    %12 = arith.select %11, %c1_i32, %c8_i32 : i32
    %13 = vector.broadcast %12 : i32 to vector<16x64xi32>
    %14 = arith.remsi %10, %13 : vector<16x64xi32>
    %c0_i32_5 = arith.constant 0 : i32
    %15 = vector.broadcast %c0_i32_5 : i32 to vector<16x64xi32>
    %16 = arith.cmpi ne, %14, %15 : vector<16x64xi32>
    %c0_i32_6 = arith.constant 0 : i32
    %17 = vector.broadcast %c0_i32_6 : i32 to vector<16x64xi32>
    %18 = arith.cmpi slt, %14, %17 : vector<16x64xi32>
    %c0_i32_7 = arith.constant 0 : i32
    %19 = arith.cmpi slt, %12, %c0_i32_7 : i32
    %20 = vector.broadcast %19 : i1 to vector<16x64xi1>
    %21 = vector.broadcast %20 : vector<16x64xi1> to vector<16x64xi1>
    %22 = arith.xori %18, %21 : vector<16x64xi1>
    %23 = arith.andi %22, %16 : vector<16x64xi1>
    %24 = vector.broadcast %12 : i32 to vector<16x64xi32>
    %25 = arith.addi %14, %24 : vector<16x64xi32>
    %26 = arith.select %23, %25, %14 : vector<16x64xi1>, vector<16x64xi32>
    %c1_i32_8 = arith.constant 1 : i32
    %27 = tpu.dynamic_rotate %9 by %c1_i32_8 dim 0 : vector<16x64xf32>, i32 -> vector<16x64xf32>
    %c-1_i32 = arith.constant -1 : i32
    %28 = vector.broadcast %c-1_i32 : i32 to vector<16x64xi32>
    %29 = arith.addi %26, %28 : vector<16x64xi32>
    %c0_i32_9 = arith.constant 0 : i32
    %30 = vector.broadcast %c0_i32_9 : i32 to vector<16x64xi32>
    %31 = arith.cmpi sge, %29, %30 : vector<16x64xi32>
    %c-1_i32_10 = arith.constant -1 : i32
    %32 = vector.broadcast %c-1_i32_10 : i32 to vector<16x64xi32>
    %33 = arith.addi %26, %32 : vector<16x64xi32>
    %c8_i32_11 = arith.constant 8 : i32
    %34 = vector.broadcast %c8_i32_11 : i32 to vector<16x64xi32>
    %35 = arith.cmpi slt, %33, %34 : vector<16x64xi32>
    %36 = arith.andi %31, %35 : vector<16x64xi1>
    %cst_12 = arith.constant 0.000000e+00 : f32
    %37 = vector.broadcast %cst_12 : f32 to vector<16x64xf32>
    %38 = arith.select %36, %27, %37 : vector<16x64xi1>, vector<16x64xf32>
    %c15_i32 = arith.constant 15 : i32
    %39 = tpu.dynamic_rotate %9 by %c15_i32 dim 0 : vector<16x64xf32>, i32 -> vector<16x64xf32>
    %c1_i32_13 = arith.constant 1 : i32
    %40 = vector.broadcast %c1_i32_13 : i32 to vector<16x64xi32>
    %41 = arith.addi %26, %40 : vector<16x64xi32>
    %c0_i32_14 = arith.constant 0 : i32
    %42 = vector.broadcast %c0_i32_14 : i32 to vector<16x64xi32>
    %43 = arith.cmpi sge, %41, %42 : vector<16x64xi32>
    %c1_i32_15 = arith.constant 1 : i32
    %44 = vector.broadcast %c1_i32_15 : i32 to vector<16x64xi32>
    %45 = arith.addi %26, %44 : vector<16x64xi32>
    %c8_i32_16 = arith.constant 8 : i32
    %46 = vector.broadcast %c8_i32_16 : i32 to vector<16x64xi32>
    %47 = arith.cmpi slt, %45, %46 : vector<16x64xi32>
    %48 = arith.andi %43, %47 : vector<16x64xi1>
    %cst_17 = arith.constant 0.000000e+00 : f32
    %49 = vector.broadcast %cst_17 : f32 to vector<16x64xf32>
    %50 = arith.select %48, %39, %49 : vector<16x64xi1>, vector<16x64xf32>
    %51 = tpu.concatenate %38, %9, %50 in 1 : vector<16x64xf32>, vector<16x64xf32>, vector<16x64xf32> -> vector<16x192xf32>
    %52 = arith.truncf %51 : vector<16x192xf32> to vector<16x192xbf16>
    %c0_18 = arith.constant 0 : index
    %c0_19 = arith.constant 0 : index
    %53 = vector.load %arg2[%c0_18, %c0_19] : memref<192x64xbf16, #tpu.memory_space<vmem>>, vector<192x64xbf16>
    %cst_20 = arith.constant dense<0.000000e+00> : vector<16x64xf32>
    %54 = tpu.matmul %52, %53, %cst_20 {dimension_numbers = #tpu.dot_dimension_numbers<[1], [0], [0], [1], [0, 0, 1, 1], [], []>} : vector<16x192xbf16>, vector<192x64xbf16>, vector<16x64xf32> -> vector<16x64xf32>
    %55 = arith.truncf %54 : vector<16x64xf32> to vector<16x64xbf16>
    %c0_21 = arith.constant 0 : index
    %c0_22 = arith.constant 0 : index
    %56 = vector.load %arg5[%c0_21, %c0_22] : memref<16x64xbf16, #tpu.memory_space<vmem>>, vector<16x64xbf16>
    tpu.vector_store %arg5[%c0_21, %c0_22], %55 {strides = array<i32>} : memref<16x64xbf16, #tpu.memory_space<vmem>>, vector<16x64xbf16>,
    %cst_23 = arith.constant dense<0.000000e+00> : vector<64xf32>
    %57 = vector.multi_reduction <add>, %54, %cst_23 [0] : vector<16x64xf32> to vector<64xf32>
    %58 = vector.shape_cast %57 : vector<64xf32> to vector<1x1x64xf32>
    %c0_24 = arith.constant 0 : index
    %c0_25 = arith.constant 0 : index
    %c0_26 = arith.constant 0 : index
    %59 = vector.load %arg6[%c0_24, %c0_25, %c0_26] : memref<1x1x64xf32, #tpu.memory_space<vmem>>, vector<1x1x64xf32>
    tpu.vector_store %arg6[%c0_24, %c0_25, %c0_26], %58 {strides = array<i32>} : memref<1x1x64xf32, #tpu.memory_space<vmem>>, vector<1x1x64xf32>,
    %60 = arith.mulf %54, %54 : vector<16x64xf32>
    %cst_27 = arith.constant dense<0.000000e+00> : vector<64xf32>
    %61 = vector.multi_reduction <add>, %60, %cst_27 [0] : vector<16x64xf32> to vector<64xf32>
    %62 = vector.shape_cast %61 : vector<64xf32> to vector<1x1x64xf32>
    %c0_28 = arith.constant 0 : index
    %c0_29 = arith.constant 0 : index
    %c0_30 = arith.constant 0 : index
    %63 = vector.load %arg7[%c0_28, %c0_29, %c0_30] : memref<1x1x64xf32, #tpu.memory_space<vmem>>, vector<1x1x64xf32>
    tpu.vector_store %arg7[%c0_28, %c0_29, %c0_30], %62 {strides = array<i32>} : memref<1x1x64xf32, #tpu.memory_space<vmem>>, vector<1x1x64xf32>,
    return
  }
  func.func @transform_0(%arg0: i32) -> (i32, i32) {
    %c0_i32 = arith.constant 0 : i32
    %c0_i32_0 = arith.constant 0 : i32
    return %arg0, %c0_i32 : i32, i32
  }
  func.func @transform_1(%arg0: i32) -> (i32, i32) {
    %c0_i32 = arith.constant 0 : i32
    %c0_i32_0 = arith.constant 0 : i32
    %c0_i32_1 = arith.constant 0 : i32
    return %c0_i32, %c0_i32_0 : i32, i32
  }
  func.func @transform_2(%arg0: i32) -> (i32, i32) {
    %c0_i32 = arith.constant 0 : i32
    %c0_i32_0 = arith.constant 0 : i32
    %c0_i32_1 = arith.constant 0 : i32
    return %c0_i32, %c0_i32_0 : i32, i32
  }
  func.func @transform_3(%arg0: i32) -> (i32, i32) {
    %c0_i32 = arith.constant 0 : i32
    %c0_i32_0 = arith.constant 0 : i32
    %c0_i32_1 = arith.constant 0 : i32
    return %c0_i32, %c0_i32_0 : i32, i32
  }
  func.func @transform_4(%arg0: i32) -> (i32, i32) {
    %c0_i32 = arith.constant 0 : i32
    %c0_i32_0 = arith.constant 0 : i32
    return %arg0, %c0_i32 : i32, i32
  }
  func.func @transform_5(%arg0: i32) -> (i32, i32, i32) {
    %c0_i32 = arith.constant 0 : i32
    %c0_i32_0 = arith.constant 0 : i32
    %c0_i32_1 = arith.constant 0 : i32
    return %arg0, %c0_i32, %c0_i32_0 : i32, i32, i32
  }
  func.func @transform_6(%arg0: i32) -> (i32, i32, i32) {
    %c0_i32 = arith.constant 0 : i32
    %c0_i32_0 = arith.constant 0 : i32
    %c0_i32_1 = arith.constant 0 : i32
    return %arg0, %c0_i32, %c0_i32_0 : i32, i32, i32
  }
}

module attributes {stable_mosaic.version = 11 : i64} {
  func.func @_residual_bn_relu_kernel(%arg0: i32, %arg1: memref<16x64xf32, #tpu.memory_space<vmem>>, %arg2: memref<16x64xbf16, #tpu.memory_space<vmem>>, %arg3: memref<1x64xf32, #tpu.memory_space<vmem>>, %arg4: memref<1x64xf32, #tpu.memory_space<vmem>>, %arg5: memref<16x64xf32, #tpu.memory_space<vmem>>) attributes {dimension_semantics = [#tpu.dimension_semantics<parallel>], iteration_bounds = array<i64: 3>, scalar_prefetch = 0 : i64, scratch_operands = 0 : i64, tpu.core_type = #tpu.core_type<tc>, window_params = [{transform_indices = @transform_0, window_bounds = array<i64: 16, 64>}, {transform_indices = @transform_1, window_bounds = array<i64: 16, 64>}, {pipeline_mode = #tpu.pipeline_mode<synchronous>, transform_indices = @transform_2, window_bounds = array<i64: 1, 64>}, {pipeline_mode = #tpu.pipeline_mode<synchronous>, transform_indices = @transform_3, window_bounds = array<i64: 1, 64>}, {transform_indices = @transform_4, window_bounds = array<i64: 16, 64>}]} {
    %c0 = arith.constant 0 : index
    %c0_0 = arith.constant 0 : index
    %0 = vector.load %arg2[%c0, %c0_0] : memref<16x64xbf16, #tpu.memory_space<vmem>>, vector<16x64xbf16>
    %1 = arith.extf %0 : vector<16x64xbf16> to vector<16x64xf32>
    %c0_1 = arith.constant 0 : index
    %c0_2 = arith.constant 0 : index
    %2 = vector.load %arg1[%c0_1, %c0_2] : memref<16x64xf32, #tpu.memory_space<vmem>>, vector<16x64xf32>
    %c0_3 = arith.constant 0 : index
    %c0_4 = arith.constant 0 : index
    %3 = vector.load %arg3[%c0_3, %c0_4] : memref<1x64xf32, #tpu.memory_space<vmem>>, vector<1x64xf32>
    %4 = vector.broadcast %3 : vector<1x64xf32> to vector<16x64xf32>
    %5 = arith.mulf %1, %4 : vector<16x64xf32>
    %6 = arith.addf %2, %5 : vector<16x64xf32>
    %c0_5 = arith.constant 0 : index
    %c0_6 = arith.constant 0 : index
    %7 = vector.load %arg4[%c0_5, %c0_6] : memref<1x64xf32, #tpu.memory_space<vmem>>, vector<1x64xf32>
    %8 = vector.broadcast %7 : vector<1x64xf32> to vector<16x64xf32>
    %9 = arith.addf %6, %8 : vector<16x64xf32>
    %cst = arith.constant 0.000000e+00 : f32
    %10 = vector.broadcast %cst : f32 to vector<16x64xf32>
    %11 = arith.maximumf %9, %10 : vector<16x64xf32>
    %c0_7 = arith.constant 0 : index
    %c0_8 = arith.constant 0 : index
    %12 = vector.load %arg5[%c0_7, %c0_8] : memref<16x64xf32, #tpu.memory_space<vmem>>, vector<16x64xf32>
    tpu.vector_store %arg5[%c0_7, %c0_8], %11 {strides = array<i32>} : memref<16x64xf32, #tpu.memory_space<vmem>>, vector<16x64xf32>,
    return
  }
  func.func @transform_0(%arg0: i32) -> (i32, i32) {
    %c0_i32 = arith.constant 0 : i32
    %c0_i32_0 = arith.constant 0 : i32
    return %arg0, %c0_i32 : i32, i32
  }
  func.func @transform_1(%arg0: i32) -> (i32, i32) {
    %c0_i32 = arith.constant 0 : i32
    %c0_i32_0 = arith.constant 0 : i32
    return %arg0, %c0_i32 : i32, i32
  }
  func.func @transform_2(%arg0: i32) -> (i32, i32) {
    %c0_i32 = arith.constant 0 : i32
    %c0_i32_0 = arith.constant 0 : i32
    %c0_i32_1 = arith.constant 0 : i32
    return %c0_i32, %c0_i32_0 : i32, i32
  }
  func.func @transform_3(%arg0: i32) -> (i32, i32) {
    %c0_i32 = arith.constant 0 : i32
    %c0_i32_0 = arith.constant 0 : i32
    %c0_i32_1 = arith.constant 0 : i32
    return %c0_i32, %c0_i32_0 : i32, i32
  }
  func.func @transform_4(%arg0: i32) -> (i32, i32) {
    %c0_i32 = arith.constant 0 : i32
    %c0_i32_0 = arith.constant 0 : i32
    return %arg0, %c0_i32 : i32, i32
  }
}

</mosaic_0001>

<llo_original>
// kernel: tile.23
$region0: #{tile.23}
  #allocation0 [shape = 's32[1]{0}', space=sflag, size = 0x4, scoped, tag = 'scoped memory for tile.23']
  %s0 = inlined_call_operand.vmem [shape: f32[8], index: 0, kind: input, shape index: {}]
  %s1 = inlined_call_operand.vmem [shape: f32[8,8], index: 1, kind: output, shape index: {}]
  // Predicated region
  $region2: #{tile.23} parent=0 // pred_check
    _
  $region3: #{tile.23} parent=0 // pred_check_branch
    %3 = sbr.rel (0) target = $region5
  $region4: #{tile.23} parent=0 // pred_region
    _
  $region5: #{tile.23} parent=0 // pred_fallthru
    _
  %v4 = vld [vmem:[%s0] ss:$0 sm:$0xff]
  %5 = vst [vmem:[%s1] sm:$0xff] %v4

// kernel: tile.24
$region0: #{tile.24}
  %s0 = inlined_call_operand.vmem [shape: f32[8,8], index: 0, kind: input, shape index: {}]
  %s1 = inlined_call_operand.vmem [shape: f32[1,64], index: 1, kind: output, shape index: {}]
  $region1: #{tile.24} parent=0
    #allocation0 [shape = 'u8[4096]{0}', space=vmem, size = 0x1000, scoped, tag = 'scoped mem for output reshape']
    %v2 = vld [vmem:[%s0] sm:$0x1]
    %vm3 = vcmask 64512
    %4 = vst.msk [vmem:[#allocation0] sm:$0x1] %vm3, %v2
    %s5 = scalar_lea.vmem %s0, 7
    %v6 = vld [vmem:[%s5] sm:$0x1]
    %7 = vrot.lane.b32.xlu0 %v6, 56
    %v8 = vpop.permute.xlu0 %7
    %vm9 = vcmask 523712
    %10 = vst.msk [vmem:[#allocation0] sm:$0x1] %vm9, %v8
    %s11 = scalar_lea.vmem %s0, 6
    %v12 = vld [vmem:[%s11] sm:$0x1]
    %13 = vrot.lane.b32.xlu0 %v12, 48
    %v14 = vpop.permute.xlu0 %13
    %vm15 = vcmask 458112
    %16 = vst.msk [vmem:[#allocation0] sm:$0x1] %vm15, %v14
    %s17 = scalar_lea.vmem %s0, 5
    %v18 = vld [vmem:[%s17] sm:$0x1]
    %19 = vrot.lane.b32.xlu0 %v18, 40
    %v20 = vpop.permute.xlu0 %19
    %vm21 = vcmask 392512
    %22 = vst.msk [vmem:[#allocation0] sm:$0x1] %vm21, %v20
    %s23 = scalar_lea.vmem %s0, 4
    %v24 = vld [vmem:[%s23] sm:$0x1]
    %25 = vrot.lane.b32.xlu0 %v24, 32
    %v26 = vpop.permute.xlu0 %25
    %vm27 = vcmask 326912
    %28 = vst.msk [vmem:[#allocation0] sm:$0x1] %vm27, %v26
    %s29 = scalar_lea.vmem %s0, 3
    %v30 = vld [vmem:[%s29] sm:$0x1]
    %31 = vrot.lane.b32.xlu0 %v30, 24
    %v32 = vpop.permute.xlu0 %31
    %vm33 = vcmask 261312
    %34 = vst.msk [vmem:[#allocation0] sm:$0x1] %vm33, %v32
    %s35 = scalar_lea.vmem %s0, 2
    %v36 = vld [vmem:[%s35] sm:$0x1]
    %37 = vrot.lane.b32.xlu0 %v36, 16
    %v38 = vpop.permute.xlu0 %37
    %vm39 = vcmask 195712
    %40 = vst.msk [vmem:[#allocation0] sm:$0x1] %vm39, %v38
    %s41 = scalar_lea.vmem %s0, 1
    %v42 = vld [vmem:[%s41] sm:$0x1]
    %43 = vrot.lane.b32.xlu0 %v42, 8
    %v44 = vpop.permute.xlu0 %43
    %vm45 = vcmask 130112
    %46 = vst.msk [vmem:[#allocation0] sm:$0x1] %vm45, %v44
    %s48 = sshllo.u32 0, 1
    %v50 = vld [vmem:[#allocation0] sm:%s48]
    %s51 = sshllo.u32 0, 1
    %52 = vst [vmem:[%s1] sm:%s51] %v50

// kernel: parallel2d_block_forward.3
$region0: #{parallel2d_block_forward.3}
  #allocation0 [shape = 'u32[]', space=smem, size = 0x4, offset = 0x4, fixed_abs, tag = 'smem constant byte address 0x4 - core index']
  #allocation1 [shape = 'u32[144,128]{1,0:T(1,128)}', space=vmem, size = 0x12000, scoped, tag = 'internal scratch']
  %s0 = inlined_call_operand.vmem [shape: f32[48,64], index: 0, kind: input, shape index: {}]
  %s1 = inlined_call_operand.vmem [shape: bf16[192,64], index: 1, kind: input, shape index: {}]
  %s2 = inlined_call_operand.vmem [shape: bf16[48,64], index: 2, kind: output, shape index: {0}]
  %s3 = inlined_call_operand.vmem [shape: f32[3,1,64], index: 3, kind: output, shape index: {1}]
  %s4 = inlined_call_operand.vmem [shape: f32[3,1,64], index: 4, kind: output, shape index: {2}]
  %5 = xla_tuple %s2, %s3, %s4
  %s6 = sld [smem:[#allocation0]]
  $region57: #{parallel2d_block_forward.3} parent=0
    _
  %s8 = ssub.s32 1, %s6
  %s9 = scalar_select 0, %s8, %s6
  loop: start=0, step=1, limit=5
  $region2: #{parallel2d_block_forward.3} parent=0 // loop_pre_header
    _
  $region3: #{parallel2d_block_forward.3} parent=0 // loop_header
    %s11 = sphi 0, %s15
    %p12 = scmp.ge.s32.totalorder %s11, 5
    %s21 = sphi 0, %s23
    %s24 = sphi 0, %s21
    %s25 = sphi 0, %s24
    %s41 = sphi 0, %s25
    %s45 = sphi 0, %s45
    %s47 = sphi 0, %s45
    %s48 = sphi 0, %s47
    %s62 = sphi 0, %s48
    %s68 = sphi 0, %s70
    %s71 = sphi 0, %s68
    %s72 = sphi 0, %s71
    %s88 = sphi 0, %s72
    %s94 = sphi 0, %s96
    %s97 = sphi 0, %s94
    %s98 = sphi 0, %s97
    %s114 = sphi 0, %s98
    %s120 = sphi 0, %s122
    %s123 = sphi 0, %s120
    %s124 = sphi 0, %s123
    %s140 = sphi 0, %s124
  $region4: #{parallel2d_block_forward.3} parent=0 // loop_header_branch
    %14 = sbr.rel (%p12) target = $region8
  $region5: #{parallel2d_block_forward.3} parent=0 // loop_body
    %s16 = ssub.s32 %s11, 1
    %s17 = ssub.s32 %s11, 2
    %s18 = sadd.s32 %s11, 1
    %s19 = ssub.s32 %s11, %s18
    %p20 = scmp.eq.s32.totalorder %s19, 0
    %s22 = sadd.s32 %s21, 1
    %s23 = scalar_select %p20, %s21, %s22
    %p26 = pneg %p20
    %p27 = scmp.eq.s32.totalorder %s11, 2
    %p28 = por %p26, %p27
    %p29 = scmp.ne.s32.totalorder %s21, %s24
    %p30 = scmp.eq.s32.totalorder %s11, 0
    %p31 = por %p29, %p30
    %p32 = scmp.ne.s32.totalorder %s21, %s24
    %p33 = scmp.eq.s32.totalorder %s16, 2
    %p34 = por %p32, %p33
    %p35 = scmp.ne.s32.totalorder %s24, %s25
    %p36 = scmp.eq.s32.totalorder %s16, 0
    %p37 = por %p35, %p36
    %p38 = scmp.ne.s32.totalorder %s24, %s25
    %p39 = scmp.eq.s32.totalorder %s17, 2
    %p40 = por %p38, %p39
    %p42 = scmp.ne.s32.totalorder %s25, %s41
    %p43 = scmp.eq.s32.totalorder %s17, 0
    %p44 = por %p42, %p43
    %s46 = sadd.s32 %s45, 1
    %p49 = scmp.eq.s32.totalorder %s11, 2
    %p50 = scmp.ne.s32.totalorder %s45, %s47
    %p51 = scmp.eq.s32.totalorder %s11, 0
    %p52 = por %p50, %p51
    %p53 = scmp.ne.s32.totalorder %s45, %s47
    %p54 = scmp.eq.s32.totalorder %s16, 2
    %p55 = por %p53, %p54
    %p56 = scmp.ne.s32.totalorder %s47, %s48
    %p57 = scmp.eq.s32.totalorder %s16, 0
    %p58 = por %p56, %p57
    %p59 = scmp.ne.s32.totalorder %s47, %s48
    %p60 = scmp.eq.s32.totalorder %s17, 2
    %p61 = por %p59, %p60
    %p63 = scmp.ne.s32.totalorder %s48, %s62
    %p64 = scmp.eq.s32.totalorder %s17, 0
    %p65 = por %p63, %p64
    %s66 = ssub.s32 %s11, %s18
    %p67 = scmp.eq.s32.totalorder %s66, 0
    %s69 = sadd.s32 %s68, 1
    %s70 = scalar_select %p67, %s68, %s69
    %p73 = pneg %p67
    %p74 = scmp.eq.s32.totalorder %s11, 2
    %p75 = por %p73, %p74
    %p76 = scmp.ne.s32.totalorder %s68, %s71
    %p77 = scmp.eq.s32.totalorder %s11, 0
    %p78 = por %p76, %p77
    %p79 = scmp.ne.s32.totalorder %s68, %s71
    %p80 = scmp.eq.s32.totalorder %s16, 2
    %p81 = por %p79, %p80
    %p82 = scmp.ne.s32.totalorder %s71, %s72
    %p83 = scmp.eq.s32.totalorder %s16, 0
    %p84 = por %p82, %p83
    %p85 = scmp.ne.s32.totalorder %s71, %s72
    %p86 = scmp.eq.s32.totalorder %s17, 2
    %p87 = por %p85, %p86
    %p89 = scmp.ne.s32.totalorder %s72, %s88
    %p90 = scmp.eq.s32.totalorder %s17, 0
    %p91 = por %p89, %p90
    %s92 = ssub.s32 %s11, %s18
    %p93 = scmp.eq.s32.totalorder %s92, 0
    %s95 = sadd.s32 %s94, 1
    %s96 = scalar_select %p93, %s94, %s95
    %p99 = pneg %p93
    %p100 = scmp.eq.s32.totalorder %s11, 2
    %p101 = por %p99, %p100
    %p102 = scmp.ne.s32.totalorder %s94, %s97
    %p103 = scmp.eq.s32.totalorder %s11, 0
    %p104 = por %p102, %p103
    %p105 = scmp.ne.s32.totalorder %s94, %s97
    %p106 = scmp.eq.s32.totalorder %s16, 2
    %p107 = por %p105, %p106
    %p108 = scmp.ne.s32.totalorder %s97, %s98
    %p109 = scmp.eq.s32.totalorder %s16, 0
    %p110 = por %p108, %p109
    %p111 = scmp.ne.s32.totalorder %s97, %s98
    %p112 = scmp.eq.s32.totalorder %s17, 2
    %p113 = por %p111, %p112
    %p115 = scmp.ne.s32.totalorder %s98, %s114
    %p116 = scmp.eq.s32.totalorder %s17, 0
    %p117 = por %p115, %p116
    %s118 = ssub.s32 %s11, %s18
    %p119 = scmp.eq.s32.totalorder %s118, 0
    %s121 = sadd.s32 %s120, 1
    %s122 = scalar_select %p119, %s120, %s121
    %p125 = pneg %p119
    %p126 = scmp.eq.s32.totalorder %s11, 2
    %p127 = por %p125, %p126
    %p128 = scmp.ne.s32.totalorder %s120, %s123
    %p129 = scmp.eq.s32.totalorder %s11, 0
    %p130 = por %p128, %p129
    %p131 = scmp.ne.s32.totalorder %s120, %s123
    %p132 = scmp.eq.s32.totalorder %s16, 2
    %p133 = por %p131, %p132
    %p134 = scmp.ne.s32.totalorder %s123, %s124
    %p135 = scmp.eq.s32.totalorder %s16, 0
    %p136 = por %p134, %p135
    %p137 = scmp.ne.s32.totalorder %s123, %s124
    %p138 = scmp.eq.s32.totalorder %s17, 2
    %p139 = por %p137, %p138
    %p141 = scmp.ne.s32.totalorder %s124, %s140
    %p142 = scmp.eq.s32.totalorder %s17, 0
    %p143 = por %p141, %p142
    %p144 = scmp.le.s32.totalorder 1, %s11
    %p145 = scmp.lt.s32.totalorder %s11, 4
    %p146 = pnand %p144, %p145
    %p147 = pneg %p146
    // Predicated region
    $region9: #{parallel2d_block_forward.3} parent=5 // pred_check
      _
    $region10: #{parallel2d_block_forward.3} parent=5 // pred_check_branch
      %149 = sbr.rel (%p146) target = $region12
    $region11: #{parallel2d_block_forward.3} parent=5 // pred_region
      %s150 = ssub.s32 %s11, 1
      // Predicated region
      $region13: #{parallel2d_block_forward.3} parent=11 // pred_check
        %p151 = pneg %p58
      $region14: #{parallel2d_block_forward.3} parent=11 // pred_check_branch
        %153 = sbr.rel (%p151) target = $region16
      $region15: #{parallel2d_block_forward.3} parent=11 // pred_region
        _
      $region16: #{parallel2d_block_forward.3} parent=11 // pred_fallthru
        _
    $region12: #{parallel2d_block_forward.3} parent=5 // pred_fallthru
      _
    %p154 = scmp.lt.s32.totalorder %s11, 3
    // Predicated region
    $region17: #{parallel2d_block_forward.3} parent=5 // pred_check
      %p155 = pneg %p154
    $region18: #{parallel2d_block_forward.3} parent=5 // pred_check_branch
      %157 = sbr.rel (%p155) target = $region20
    $region19: #{parallel2d_block_forward.3} parent=5 // pred_region
      // Predicated region
      $region21: #{parallel2d_block_forward.3} parent=19 // pred_check
        %p158 = pneg %p31
      $region22: #{parallel2d_block_forward.3} parent=19 // pred_check_branch
        %160 = sbr.rel (%p158) target = $region24
      $region23: #{parallel2d_block_forward.3} parent=19 // pred_region
        %s161 = smul.u32 2, %s11
        %p162 = scmp.lt.s32.totalorder %s161, 5
        %s163 = scalar_select %p162, %s161, 5
        %s164 = smul.addr %s163, 8
        %s165 = scalar_lea.vmem %s0, %s164
        %s166 = smul.u32 2, %s11
      $region24: #{parallel2d_block_forward.3} parent=19 // pred_fallthru
        _
    $region20: #{parallel2d_block_forward.3} parent=5 // pred_fallthru
      _
    %p167 = scmp.le.s32.totalorder 1, %s11
    %p168 = scmp.lt.s32.totalorder %s11, 4
    %p169 = pnand %p167, %p168
    %p170 = pneg %p169
    // Predicated region
    $region25: #{parallel2d_block_forward.3} parent=5 // pred_check
      _
    $region26: #{parallel2d_block_forward.3} parent=5 // pred_check_branch
      %172 = sbr.rel (%p169) target = $region28
    $region27: #{parallel2d_block_forward.3} parent=5 // pred_region
      %s173 = ssub.s32 %s11, 1
      %s174 = smul.u32 2, %s16
      %p175 = scmp.lt.s32.totalorder %s174, 5
      %s176 = scalar_select %p175, %s174, 5
      %s177 = smul.addr %s176, 8
      %s178 = scalar_lea.vmem %s0, %s177
      %p179 = pneg %p37
      %p180 = pneg %p34
      %p181 = pneg %p58
      %p182 = pneg %p55
      %p183 = pneg %p84
      %p184 = pneg %p81
      %s185 = smul.u32 2, %s16
      %p186 = scmp.lt.s32.totalorder %s185, 5
      %s187 = scalar_select %p186, %s185, 5
      %s188 = smul.addr %s187, 4
      %s189 = scalar_lea.vmem %s2, %s188
      %p190 = pneg %p110
      %p191 = pneg %p107
      %p192 = scmp.lt.s32.totalorder %s16, 2
      %s193 = scalar_select %p192, %s16, 2
      %s194 = scalar_lea.vmem %s3, %s193
      %p195 = pneg %p136
      %p196 = pneg %p133
      %p197 = scmp.lt.s32.totalorder %s16, 2
      %s198 = scalar_select %p197, %s16, 2
      %s199 = scalar_lea.vmem %s4, %s198
      %s200 = smul.u32 2, %s16
      %p201 = scmp.lt.s32.totalorder %s200, 5
      %s202 = scalar_select %p201, %s200, 5
      %s203 = smul.addr %s202, 8
      %s204 = scalar_lea.vmem %s0, %s203
      %s205 = smul.u32 2, %s16
      %s206 = smul.u32 2, %s16
      %p207 = scmp.lt.s32.totalorder %s206, 5
      %s208 = scalar_select %p207, %s206, 5
      %s209 = smul.addr %s208, 4
      %s210 = scalar_lea.vmem %s2, %s209
      %s211 = smul.u32 2, %s16
      %p212 = scmp.lt.s32.totalorder %s16, 2
      %s213 = scalar_select %p212, %s16, 2
      %s214 = scalar_lea.vmem %s3, %s213
      %p215 = scmp.lt.s32.totalorder %s16, 2
      %s216 = scalar_select %p215, %s16, 2
      %s217 = scalar_lea.vmem %s4, %s216
      %v219 = vld [vmem:[%s204] sm:$0xff]
      %v220 = vld [vmem:[%s204 + $0x8] sm:$0xff]
      %v221 = vlaneseq
      %v222 = vshrl.u32 %v221, 7
      %v223 = vadd.s32 %v222, 8
      %vm224 = vcmp.lt.s32.totalorder %v222, 0
      %v225 = vsub.s32 0, %v222
      %v226 = vsel %vm224, %v225, %v222
      %v227 = vshrl.u32 %v226, 3
      %v228 = vand.u32 %v226, 7
      %v229 = vsub.s32 0, %v228
      %v230 = vsel %vm224, %v229, %v228
      %vm231 = vcmp.lt.s32.totalorder %v223, 0
      %v232 = vsub.s32 0, %v223
      %v233 = vsel %vm231, %v232, %v223
      %v234 = vshrl.u32 %v233, 3
      %v235 = vand.u32 %v233, 7
      %v236 = vsub.s32 0, %v235
      %v237 = vsel %vm231, %v236, %v235
      %vm238 = vcmp.ne.s32.totalorder %v230, 0
      %vm239 = vcmp.ne.s32.totalorder %v237, 0
      %vm240 = vcmp.lt.s32.totalorder %v230, 0
      %vm241 = vcmp.lt.s32.totalorder %v237, 0
      %vm242 = vmand %vm240, %vm238
      %vm243 = vmand %vm241, %vm239
      %v244 = vadd.s32 %v230, 8
      %v245 = vadd.s32 %v237, 8
      %v246 = vsel %vm242, %v244, %v230
      %v247 = vsel %vm243, %v245, %v237
      %v248 = vrot.slane %v219, 7
      %v249 = vrot.slane %v220, 7
      %vm250 = vcmp.lt.s32.totalorder %v222, 1
      %v251 = vsel %vm250, %v248, %v249
      %v252 = vsel %vm250, %v249, %v248
      %v253 = vadd.s32 %v246, 4294967295
      %v254 = vadd.s32 %v247, 4294967295
      %vm255 = vcmp.ge.s32.totalorder %v253, 0
      %vm256 = vcmp.ge.s32.totalorder %v254, 0
      %vm257 = vcmp.lt.s32.totalorder %v253, 8
      %vm258 = vcmp.lt.s32.totalorder %v254, 8
      %vm259 = vmand %vm255, %vm257
      %vm260 = vmand %vm256, %vm258
      %v261 = vsel %vm259, %v252, 0.0
      %v262 = vsel %vm260, %v251, 0.0
      %v263 = vrot.slane %v219, 1
      %v264 = vrot.slane %v220, 1
      %vm265 = vcmp.lt.s32.totalorder %v222, 7
      %v266 = vsel %vm265, %v263, %v264
      %v267 = vsel %vm265, %v264, %v263
      %v268 = vadd.s32 %v246, 1
      %v269 = vadd.s32 %v247, 1
      %vm270 = vcmp.ge.s32.totalorder %v268, 0
      %vm271 = vcmp.ge.s32.totalorder %v269, 0
      %vm272 = vcmp.lt.s32.totalorder %v268, 8
      %vm273 = vcmp.lt.s32.totalorder %v269, 8
      %vm274 = vmand %vm270, %vm272
      %vm275 = vmand %vm271, %vm273
      %v276 = vsel %vm274, %v266, 0.0
      %v277 = vsel %vm275, %v267, 0.0
      %280 = vrot.lane.b32.xlu0 %v219, 64
      %v281 = vpop.permute.xlu0 %280
      %282 = vrot.lane.b32.xlu0 %v220, 64
      %v283 = vpop.permute.xlu0 %282
      %vm286 = vcmask 523264
      %v287 = vsel %vm286, %v261, %v281
      %v288 = vsel %vm286, %v262, %v283
      %v289 = vpack.c.bf16 %v288, %v287
      %v290 = vpack.c.bf16 %v277, %v276
      %v291 = vld [vmem:[%s1] sm:$0xf]
      %v292 = vld [vmem:[%s1 + $0x4] sm:$0xf]
      %v293 = vld [vmem:[%s1 + $0x8] sm:$0xf]
      %v294 = vld [vmem:[%s1 + $0xc] sm:$0xf]
      %v295 = vld [vmem:[%s1 + $0x10] sm:$0xf]
      %v296 = vld [vmem:[%s1 + $0x14] sm:$0xf]
      %v297 = vld [vmem:[%s1 + $0x18] sm:$0xf]
      %v298 = vld [vmem:[%s1 + $0x1c] sm:$0xf]
      %v299 = vld [vmem:[%s1 + $0x20] sm:$0xf]
      %v300 = vld [vmem:[%s1 + $0x24] sm:$0xf]
      %v301 = vld [vmem:[%s1 + $0x28] sm:$0xf]
      %v302 = vld [vmem:[%s1 + $0x2c] sm:$0xf]
      %v303 = vld [vmem:[%s1 + $0x30] sm:$0xf]
      %v304 = vld [vmem:[%s1 + $0x34] sm:$0xf]
      %v305 = vld [vmem:[%s1 + $0x38] sm:$0xf]
      %v306 = vld [vmem:[%s1 + $0x3c] sm:$0xf]
      %v307 = vld [vmem:[%s1 + $0x40] sm:$0xf]
      %v308 = vld [vmem:[%s1 + $0x44] sm:$0xf]
      %v309 = vld [vmem:[%s1 + $0x48] sm:$0xf]
      %v310 = vld [vmem:[%s1 + $0x4c] sm:$0xf]
      %v311 = vld [vmem:[%s1 + $0x50] sm:$0xf]
      %v312 = vld [vmem:[%s1 + $0x54] sm:$0xf]
      %v313 = vld [vmem:[%s1 + $0x58] sm:$0xf]
      %v314 = vld [vmem:[%s1 + $0x5c] sm:$0xf]
      %v339 = vunpack.c.l.b16 %v291
      %v340 = vunpack.c.l.b16 %v292
      %v341 = vunpack.c.l.b16 %v293
      %v342 = vunpack.c.l.b16 %v294
      %v343 = vunpack.c.l.b16 %v295
      %v344 = vunpack.c.l.b16 %v296
      %v345 = vunpack.c.l.b16 %v297
      %v346 = vunpack.c.l.b16 %v298
      %v347 = vunpack.c.l.b16 %v299
      %v348 = vunpack.c.l.b16 %v300
      %v349 = vunpack.c.l.b16 %v301
      %v350 = vunpack.c.l.b16 %v302
      %v351 = vunpack.c.l.b16 %v303
      %v352 = vunpack.c.l.b16 %v304
      %v353 = vunpack.c.l.b16 %v305
      %v354 = vunpack.c.l.b16 %v306
      %v355 = vunpack.c.l.b16 %v307
      %v356 = vunpack.c.l.b16 %v308
      %v357 = vunpack.c.l.b16 %v309
      %v358 = vunpack.c.l.b16 %v310
      %v359 = vunpack.c.l.b16 %v311
      %v360 = vunpack.c.l.b16 %v312
      %v361 = vunpack.c.l.b16 %v313
      %v362 = vunpack.c.l.b16 %v314
      %v363 = vpack.c.b16 %v340, %v339
      %v364 = vpack.c.b16 %v342, %v341
      %v365 = vpack.c.b16 %v344, %v343
      %v366 = vpack.c.b16 %v346, %v345
      %v367 = vpack.c.b16 %v348, %v347
      %v368 = vpack.c.b16 %v350, %v349
      %v369 = vpack.c.b16 %v352, %v351
      %v370 = vpack.c.b16 %v354, %v353
      %v371 = vpack.c.b16 %v356, %v355
      %v372 = vpack.c.b16 %v358, %v357
      %v373 = vpack.c.b16 %v360, %v359
      %v374 = vpack.c.b16 %v362, %v361
      %v388 = vsel %vm286, %v290, 0
      %390 = vmatprep.subr.bf16.mxu0 0
      %391 = vmatpush1.bf16.msra.mxu0 %v363
      %392 = vmatprep.subr.bf16.mxu0 0
      %393 = vmatpush1.bf16.msra.mxu0 %v364
      %394 = vmatprep.subr.bf16.mxu0 0
      %395 = vmatpush1.bf16.msra.mxu0 %v365
      %396 = vmatprep.subr.bf16.mxu0 0
      %397 = vmatpush1.bf16.msra.mxu0 %v366
      %398 = vmatprep.subr.bf16.mxu0 0
      %399 = vmatpush1.bf16.msra.mxu0 %v367
      %400 = vmatprep.subr.bf16.mxu0 0
      %401 = vmatpush1.bf16.msra.mxu0 %v368
      %402 = vmatprep.subr.bf16.mxu0 0
      %403 = vmatpush1.bf16.msra.mxu0 %v369
      %404 = vmatprep.subr.bf16.mxu0 0
      %405 = vmatpush1.bf16.msra.mxu0 %v370
      %406 = vmatprep.subr.bf16.mxu0 0
      %407 = vmatpush1.bf16.msra.mxu0 %v371
      %408 = vmatprep.subr.bf16.mxu0 0
      %409 = vmatpush1.bf16.msra.mxu0 %v372
      %410 = vmatprep.subr.bf16.mxu0 0
      %411 = vmatpush1.bf16.msra.mxu0 %v373
      %412 = vmatprep.subr.bf16.mxu0 0
      %413 = vmatpush1.bf16.msra.mxu0 %v374
      %414 = vmatprep.subr.bf16.mxu0 0
      %415 = vmatpush1.bf16.msra.mxu0 0
      %416 = vmatprep.subr.bf16.mxu0 0
      %417 = vmatpush1.bf16.msra.mxu0 0
      %418 = vmatprep.subr.bf16.mxu0 0
      %419 = vmatpush1.bf16.msra.mxu0 0
      %420 = vmatprep.subr.bf16.mxu0 0
      %421 = vmatpush1.bf16.msra.mxu0 0
      %422 = vmatprep.mubr.bf16.mxu0 %v388
      %423 = vmatmul.mubr.bf16.gmra.mrb[0].mxu0 %v289
      %v424 = vpop.f32.mrb[0].mxu0
      %v425 = vadd.f32 0.0, %v424
      %v426 = vpop.f32.mrb[0].mxu0
      %v427 = vpop.f32.mrb[0].mxu0
      %v428 = vadd.f32 0.0, %v427
      %v429 = vpop.f32.mrb[0].mxu0
      %430 = vdwg.mxu0
      %v431 = vpack.c.bf16 %v428, %v425
      %v433 = vunpack.c.l.b16 %v431
      %v434 = vunpack.c.h.b16 %v431
      %v435 = vpack.c.b16 %v433, %v433
      %v436 = vpack.c.b16 %v434, %v434
      %vm439 = vcmask 519168
      %440 = vst.msk [vmem:[%s210] sm:$0xf] %vm439, %v435
      %441 = vst.msk [vmem:[%s210 + $0x4] sm:$0xf] %vm439, %v436
      %v442 = vsel %vm286, %v425, 0.0
      %v443 = vsel %vm286, %v428, 0.0
      %v444 = vadd.f32 %v442, %v443
      %v445 = vrot.slane %v444, 4
      %v446 = vadd.f32 %v444, %v445
      %v447 = vrot.slane %v446, 2
      %v448 = vadd.f32 %v446, %v447
      %v449 = vrot.slane %v448, 1
      %v450 = vadd.f32 %v448, %v449
      %vm451 = vcmask 516096
      %452 = vst.msk [vmem:[%s214] sm:$0x1] %vm451, %v450
      %v453 = vmul.f32 %v425, %v425
      %v454 = vmul.f32 %v428, %v428
      %v455 = vsel %vm286, %v453, 0.0
      %v456 = vsel %vm286, %v454, 0.0
      %v457 = vadd.f32 %v455, %v456
      %v458 = vrot.slane %v457, 4
      %v459 = vadd.f32 %v457, %v458
      %v460 = vrot.slane %v459, 2
      %v461 = vadd.f32 %v459, %v460
      %v462 = vrot.slane %v461, 1
      %v463 = vadd.f32 %v461, %v462
      %464 = vst.msk [vmem:[%s217] sm:$0x1] %vm451, %v463
      %s465 = smul.u32 2, %s16
      %p466 = scmp.lt.s32.totalorder %s465, 5
      %s467 = scalar_select %p466, %s465, 5
      %s468 = smul.addr %s467, 4
      %s469 = scalar_lea.vmem %s2, %s468
      %p470 = scmp.lt.s32.totalorder %s16, 2
      %s471 = scalar_select %p470, %s16, 2
      %s472 = scalar_lea.vmem %s3, %s471
      %p473 = scmp.lt.s32.totalorder %s16, 2
      %s474 = scalar_select %p473, %s16, 2
      %s475 = scalar_lea.vmem %s4, %s474
      // Predicated region
      $region29: #{parallel2d_block_forward.3} parent=27 // pred_check
        %p476 = pneg %p81
      $region30: #{parallel2d_block_forward.3} parent=27 // pred_check_branch
        %478 = sbr.rel (%p476) target = $region32
      $region31: #{parallel2d_block_forward.3} parent=27 // pred_region
        %s479 = smul.u32 2, %s16
      $region32: #{parallel2d_block_forward.3} parent=27 // pred_fallthru
        _
      // Predicated region
      $region33: #{parallel2d_block_forward.3} parent=27 // pred_check
        %p480 = pneg %p107
      $region34: #{parallel2d_block_forward.3} parent=27 // pred_check_branch
        %482 = sbr.rel (%p480) target = $region36
      $region35: #{parallel2d_block_forward.3} parent=27 // pred_region
        _
      $region36: #{parallel2d_block_forward.3} parent=27 // pred_fallthru
        _
      // Predicated region
      $region37: #{parallel2d_block_forward.3} parent=27 // pred_check
        %p483 = pneg %p133
      $region38: #{parallel2d_block_forward.3} parent=27 // pred_check_branch
        %485 = sbr.rel (%p483) target = $region40
      $region39: #{parallel2d_block_forward.3} parent=27 // pred_region
        _
      $region40: #{parallel2d_block_forward.3} parent=27 // pred_fallthru
        _
    $region28: #{parallel2d_block_forward.3} parent=5 // pred_fallthru
      _
    %p486 = scmp.le.s32.totalorder 2, %s11
    // Predicated region
    $region41: #{parallel2d_block_forward.3} parent=5 // pred_check
      %p487 = pneg %p486
    $region42: #{parallel2d_block_forward.3} parent=5 // pred_check_branch
      %489 = sbr.rel (%p487) target = $region44
    $region43: #{parallel2d_block_forward.3} parent=5 // pred_region
      %s490 = ssub.s32 %s11, 2
      // Predicated region
      $region45: #{parallel2d_block_forward.3} parent=43 // pred_check
        %p491 = pneg %p87
      $region46: #{parallel2d_block_forward.3} parent=43 // pred_check_branch
        %493 = sbr.rel (%p491) target = $region48
      $region47: #{parallel2d_block_forward.3} parent=43 // pred_region
        %s494 = smul.u32 2, %s17
        %p495 = scmp.lt.s32.totalorder %s494, 5
        %s496 = scalar_select %p495, %s494, 5
        %s497 = smul.addr %s496, 4
        %s498 = scalar_lea.vmem %s2, %s497
      $region48: #{parallel2d_block_forward.3} parent=43 // pred_fallthru
        _
      // Predicated region
      $region49: #{parallel2d_block_forward.3} parent=43 // pred_check
        %p499 = pneg %p113
      $region50: #{parallel2d_block_forward.3} parent=43 // pred_check_branch
        %501 = sbr.rel (%p499) target = $region52
      $region51: #{parallel2d_block_forward.3} parent=43 // pred_region
        %p502 = scmp.lt.s32.totalorder %s17, 2
        %s503 = scalar_select %p502, %s17, 2
        %s504 = scalar_lea.vmem %s3, %s503
      $region52: #{parallel2d_block_forward.3} parent=43 // pred_fallthru
        _
      // Predicated region
      $region53: #{parallel2d_block_forward.3} parent=43 // pred_check
        %p505 = pneg %p139
      $region54: #{parallel2d_block_forward.3} parent=43 // pred_check_branch
        %507 = sbr.rel (%p505) target = $region56
      $region55: #{parallel2d_block_forward.3} parent=43 // pred_region
        %p508 = scmp.lt.s32.totalorder %s17, 2
        %s509 = scalar_select %p508, %s17, 2
        %s510 = scalar_lea.vmem %s4, %s509
      $region56: #{parallel2d_block_forward.3} parent=43 // pred_fallthru
        _
    $region44: #{parallel2d_block_forward.3} parent=5 // pred_fallthru
      _
  $region6: #{parallel2d_block_forward.3} parent=0 // loop_footer
    %s15 = sadd.s32 1, %s11
  $region7: #{parallel2d_block_forward.3} parent=0 // loop_footer_branch
    %10 = sbr.rel target = $region3
  $region8: #{parallel2d_block_forward.3} parent=0 // loop_exit
    _

// kernel: parallel2d_block_forward.5
$region0: #{parallel2d_block_forward.5}
  #allocation0 [shape = 'u32[]', space=smem, size = 0x4, offset = 0x4, fixed_abs, tag = 'smem constant byte address 0x4 - core index']
  #allocation1 [shape = 'u32[144,128]{1,0:T(1,128)}', space=vmem, size = 0x12000, scoped, tag = 'internal scratch']
  %s0 = inlined_call_operand.vmem [shape: f32[48,64], index: 0, kind: input, shape index: {}]
  %s1 = inlined_call_operand.vmem [shape: bf16[48,64], index: 1, kind: input, shape index: {}]
  %s2 = inlined_call_operand.vmem [shape: f32[1,64], index: 2, kind: input, shape index: {}]
  %s3 = inlined_call_operand.vmem [shape: f32[1,64], index: 3, kind: input, shape index: {}]
  %s4 = inlined_call_operand.vmem [shape: f32[48,64], index: 4, kind: output, shape index: {}]
  %s5 = sld [smem:[#allocation0]]
  $region49: #{parallel2d_block_forward.5} parent=0
    _
  %s7 = ssub.s32 1, %s5
  %s8 = scalar_select 0, %s7, %s5
  loop: start=0, step=1, limit=5
  $region2: #{parallel2d_block_forward.5} parent=0 // loop_pre_header
    _
  $region3: #{parallel2d_block_forward.5} parent=0 // loop_header
    %s10 = sphi 0, %s14
    %p11 = scmp.ge.s32.totalorder %s10, 5
    %s20 = sphi 0, %s22
    %s23 = sphi 0, %s20
    %s24 = sphi 0, %s23
    %s40 = sphi 0, %s24
    %s46 = sphi 0, %s48
    %s49 = sphi 0, %s46
    %s50 = sphi 0, %s49
    %s66 = sphi 0, %s50
    %s70 = sphi 0, %s70
    %s72 = sphi 0, %s70
    %s73 = sphi 0, %s72
    %s87 = sphi 0, %s73
    %s91 = sphi 0, %s91
    %s93 = sphi 0, %s91
    %s94 = sphi 0, %s93
    %s108 = sphi 0, %s94
    %s114 = sphi 0, %s116
    %s117 = sphi 0, %s114
    %s118 = sphi 0, %s117
    %s134 = sphi 0, %s118
  $region4: #{parallel2d_block_forward.5} parent=0 // loop_header_branch
    %13 = sbr.rel (%p11) target = $region8
  $region5: #{parallel2d_block_forward.5} parent=0 // loop_body
    %s15 = ssub.s32 %s10, 1
    %s16 = ssub.s32 %s10, 2
    %s17 = sadd.s32 %s10, 1
    %s18 = ssub.s32 %s10, %s17
    %p19 = scmp.eq.s32.totalorder %s18, 0
    %s21 = sadd.s32 %s20, 1
    %s22 = scalar_select %p19, %s20, %s21
    %p25 = pneg %p19
    %p26 = scmp.eq.s32.totalorder %s10, 2
    %p27 = por %p25, %p26
    %p28 = scmp.ne.s32.totalorder %s20, %s23
    %p29 = scmp.eq.s32.totalorder %s10, 0
    %p30 = por %p28, %p29
    %p31 = scmp.ne.s32.totalorder %s20, %s23
    %p32 = scmp.eq.s32.totalorder %s15, 2
    %p33 = por %p31, %p32
    %p34 = scmp.ne.s32.totalorder %s23, %s24
    %p35 = scmp.eq.s32.totalorder %s15, 0
    %p36 = por %p34, %p35
    %p37 = scmp.ne.s32.totalorder %s23, %s24
    %p38 = scmp.eq.s32.totalorder %s16, 2
    %p39 = por %p37, %p38
    %p41 = scmp.ne.s32.totalorder %s24, %s40
    %p42 = scmp.eq.s32.totalorder %s16, 0
    %p43 = por %p41, %p42
    %s44 = ssub.s32 %s10, %s17
    %p45 = scmp.eq.s32.totalorder %s44, 0
    %s47 = sadd.s32 %s46, 1
    %s48 = scalar_select %p45, %s46, %s47
    %p51 = pneg %p45
    %p52 = scmp.eq.s32.totalorder %s10, 2
    %p53 = por %p51, %p52
    %p54 = scmp.ne.s32.totalorder %s46, %s49
    %p55 = scmp.eq.s32.totalorder %s10, 0
    %p56 = por %p54, %p55
    %p57 = scmp.ne.s32.totalorder %s46, %s49
    %p58 = scmp.eq.s32.totalorder %s15, 2
    %p59 = por %p57, %p58
    %p60 = scmp.ne.s32.totalorder %s49, %s50
    %p61 = scmp.eq.s32.totalorder %s15, 0
    %p62 = por %p60, %p61
    %p63 = scmp.ne.s32.totalorder %s49, %s50
    %p64 = scmp.eq.s32.totalorder %s16, 2
    %p65 = por %p63, %p64
    %p67 = scmp.ne.s32.totalorder %s50, %s66
    %p68 = scmp.eq.s32.totalorder %s16, 0
    %p69 = por %p67, %p68
    %s71 = sadd.s32 %s70, 1
    %p74 = scmp.eq.s32.totalorder %s10, 2
    %p75 = scmp.ne.s32.totalorder %s70, %s72
    %p76 = scmp.eq.s32.totalorder %s10, 0
    %p77 = por %p75, %p76
    %p78 = scmp.ne.s32.totalorder %s70, %s72
    %p79 = scmp.eq.s32.totalorder %s15, 2
    %p80 = por %p78, %p79
    %p81 = scmp.ne.s32.totalorder %s72, %s73
    %p82 = scmp.eq.s32.totalorder %s15, 0
    %p83 = por %p81, %p82
    %p84 = scmp.ne.s32.totalorder %s72, %s73
    %p85 = scmp.eq.s32.totalorder %s16, 2
    %p86 = por %p84, %p85
    %p88 = scmp.ne.s32.totalorder %s73, %s87
    %p89 = scmp.eq.s32.totalorder %s16, 0
    %p90 = por %p88, %p89
    %s92 = sadd.s32 %s91, 1
    %p95 = scmp.eq.s32.totalorder %s10, 2
    %p96 = scmp.ne.s32.totalorder %s91, %s93
    %p97 = scmp.eq.s32.totalorder %s10, 0
    %p98 = por %p96, %p97
    %p99 = scmp.ne.s32.totalorder %s91, %s93
    %p100 = scmp.eq.s32.totalorder %s15, 2
    %p101 = por %p99, %p100
    %p102 = scmp.ne.s32.totalorder %s93, %s94
    %p103 = scmp.eq.s32.totalorder %s15, 0
    %p104 = por %p102, %p103
    %p105 = scmp.ne.s32.totalorder %s93, %s94
    %p106 = scmp.eq.s32.totalorder %s16, 2
    %p107 = por %p105, %p106
    %p109 = scmp.ne.s32.totalorder %s94, %s108
    %p110 = scmp.eq.s32.totalorder %s16, 0
    %p111 = por %p109, %p110
    %s112 = ssub.s32 %s10, %s17
    %p113 = scmp.eq.s32.totalorder %s112, 0
    %s115 = sadd.s32 %s114, 1
    %s116 = scalar_select %p113, %s114, %s115
    %p119 = pneg %p113
    %p120 = scmp.eq.s32.totalorder %s10, 2
    %p121 = por %p119, %p120
    %p122 = scmp.ne.s32.totalorder %s114, %s117
    %p123 = scmp.eq.s32.totalorder %s10, 0
    %p124 = por %p122, %p123
    %p125 = scmp.ne.s32.totalorder %s114, %s117
    %p126 = scmp.eq.s32.totalorder %s15, 2
    %p127 = por %p125, %p126
    %p128 = scmp.ne.s32.totalorder %s117, %s118
    %p129 = scmp.eq.s32.totalorder %s15, 0
    %p130 = por %p128, %p129
    %p131 = scmp.ne.s32.totalorder %s117, %s118
    %p132 = scmp.eq.s32.totalorder %s16, 2
    %p133 = por %p131, %p132
    %p135 = scmp.ne.s32.totalorder %s118, %s134
    %p136 = scmp.eq.s32.totalorder %s16, 0
    %p137 = por %p135, %p136
    %p138 = scmp.le.s32.totalorder 1, %s10
    %p139 = scmp.lt.s32.totalorder %s10, 4
    %p140 = pnand %p138, %p139
    %p141 = pneg %p140
    // Predicated region
    $region9: #{parallel2d_block_forward.5} parent=5 // pred_check
      _
    $region10: #{parallel2d_block_forward.5} parent=5 // pred_check_branch
      %143 = sbr.rel (%p140) target = $region12
    $region11: #{parallel2d_block_forward.5} parent=5 // pred_region
      %s144 = ssub.s32 %s10, 1
      // Predicated region
      $region13: #{parallel2d_block_forward.5} parent=11 // pred_check
        %p145 = pneg %p83
      $region14: #{parallel2d_block_forward.5} parent=11 // pred_check_branch
        %147 = sbr.rel (%p145) target = $region16
      $region15: #{parallel2d_block_forward.5} parent=11 // pred_region
        _
      $region16: #{parallel2d_block_forward.5} parent=11 // pred_fallthru
        _
      // Predicated region
      $region17: #{parallel2d_block_forward.5} parent=11 // pred_check
        %p148 = pneg %p104
      $region18: #{parallel2d_block_forward.5} parent=11 // pred_check_branch
        %150 = sbr.rel (%p148) target = $region20
      $region19: #{parallel2d_block_forward.5} parent=11 // pred_region
        _
      $region20: #{parallel2d_block_forward.5} parent=11 // pred_fallthru
        _
    $region12: #{parallel2d_block_forward.5} parent=5 // pred_fallthru
      _
    %p151 = scmp.lt.s32.totalorder %s10, 3
    // Predicated region
    $region21: #{parallel2d_block_forward.5} parent=5 // pred_check
      %p152 = pneg %p151
    $region22: #{parallel2d_block_forward.5} parent=5 // pred_check_branch
      %154 = sbr.rel (%p152) target = $region24
    $region23: #{parallel2d_block_forward.5} parent=5 // pred_region
      // Predicated region
      $region25: #{parallel2d_block_forward.5} parent=23 // pred_check
        %p155 = pneg %p30
      $region26: #{parallel2d_block_forward.5} parent=23 // pred_check_branch
        %157 = sbr.rel (%p155) target = $region28
      $region27: #{parallel2d_block_forward.5} parent=23 // pred_region
        %s158 = smul.u32 2, %s10
        %p159 = scmp.lt.s32.totalorder %s158, 5
        %s160 = scalar_select %p159, %s158, 5
        %s161 = smul.addr %s160, 8
        %s162 = scalar_lea.vmem %s0, %s161
        %s163 = smul.u32 2, %s10
      $region28: #{parallel2d_block_forward.5} parent=23 // pred_fallthru
        _
      // Predicated region
      $region29: #{parallel2d_block_forward.5} parent=23 // pred_check
        %p164 = pneg %p56
      $region30: #{parallel2d_block_forward.5} parent=23 // pred_check_branch
        %166 = sbr.rel (%p164) target = $region32
      $region31: #{parallel2d_block_forward.5} parent=23 // pred_region
        %s167 = smul.u32 2, %s10
        %p168 = scmp.lt.s32.totalorder %s167, 5
        %s169 = scalar_select %p168, %s167, 5
        %s170 = smul.addr %s169, 4
        %s171 = scalar_lea.vmem %s1, %s170
        %s172 = smul.u32 2, %s10
      $region32: #{parallel2d_block_forward.5} parent=23 // pred_fallthru
        _
    $region24: #{parallel2d_block_forward.5} parent=5 // pred_fallthru
      _
    %p173 = scmp.le.s32.totalorder 1, %s10
    %p174 = scmp.lt.s32.totalorder %s10, 4
    %p175 = pnand %p173, %p174
    %p176 = pneg %p175
    // Predicated region
    $region33: #{parallel2d_block_forward.5} parent=5 // pred_check
      _
    $region34: #{parallel2d_block_forward.5} parent=5 // pred_check_branch
      %178 = sbr.rel (%p175) target = $region36
    $region35: #{parallel2d_block_forward.5} parent=5 // pred_region
      %s179 = ssub.s32 %s10, 1
      %s180 = smul.u32 2, %s15
      %p181 = scmp.lt.s32.totalorder %s180, 5
      %s182 = scalar_select %p181, %s180, 5
      %s183 = smul.addr %s182, 8
      %s184 = scalar_lea.vmem %s0, %s183
      %p185 = pneg %p36
      %p186 = pneg %p33
      %s187 = smul.u32 2, %s15
      %p188 = scmp.lt.s32.totalorder %s187, 5
      %s189 = scalar_select %p188, %s187, 5
      %s190 = smul.addr %s189, 4
      %s191 = scalar_lea.vmem %s1, %s190
      %p192 = pneg %p62
      %p193 = pneg %p59
      %p194 = pneg %p83
      %p195 = pneg %p80
      %p196 = pneg %p104
      %p197 = pneg %p101
      %p198 = pneg %p130
      %p199 = pneg %p127
      %s200 = smul.u32 2, %s15
      %p201 = scmp.lt.s32.totalorder %s200, 5
      %s202 = scalar_select %p201, %s200, 5
      %s203 = smul.addr %s202, 8
      %s204 = scalar_lea.vmem %s4, %s203
      %s205 = smul.u32 2, %s15
      %p206 = scmp.lt.s32.totalorder %s205, 5
      %s207 = scalar_select %p206, %s205, 5
      %s208 = smul.addr %s207, 8
      %s209 = scalar_lea.vmem %s0, %s208
      %s210 = smul.u32 2, %s15
      %s211 = smul.u32 2, %s15
      %p212 = scmp.lt.s32.totalorder %s211, 5
      %s213 = scalar_select %p212, %s211, 5
      %s214 = smul.addr %s213, 4
      %s215 = scalar_lea.vmem %s1, %s214
      %s216 = smul.u32 2, %s15
      %s217 = smul.u32 2, %s15
      %p218 = scmp.lt.s32.totalorder %s217, 5
      %s219 = scalar_select %p218, %s217, 5
      %s220 = smul.addr %s219, 8
      %s221 = scalar_lea.vmem %s4, %s220
      %s222 = smul.u32 2, %s15
      %v223 = vld [vmem:[%s215] sm:$0xf]
      %v224 = vld [vmem:[%s215 + $0x4] sm:$0xf]
      %v225 = vunpack.c.l.bf16 %v223
      %v226 = vunpack.c.l.bf16 %v224
      %v227 = vld [vmem:[%s209] sm:$0xff]
      %v228 = vld [vmem:[%s209 + $0x8] sm:$0xff]
      %v229 = vld [vmem:[%s2] sm:$0x1]
      %v231 = vlaneseq
      %v232 = vshrl.u32 %v231, 7
      %v233 = vsub.s32 0, %v232
      %v234 = vrot.slane %v229, %v233
      %v236 = vmul.f32 %v225, %v234
      %v237 = vmul.f32 %v226, %v234
      %v238 = vadd.f32 %v227, %v236
      %v239 = vadd.f32 %v228, %v237
      %v240 = vld [vmem:[%s3] sm:$0x1]
      %v242 = vlaneseq
      %v243 = vshrl.u32 %v242, 7
      %v244 = vsub.s32 0, %v243
      %v245 = vrot.slane %v240, %v244
      %v247 = vadd.f32 %v238, %v245
      %v248 = vadd.f32 %v239, %v245
      %v249 = vmax.f32 %v247, 0.0
      %v250 = vmax.f32 %v248, 0.0
      %vm251 = vcmask 523264
      %252 = vst.msk [vmem:[%s221] sm:$0xff] %vm251, %v249
      %253 = vst.msk [vmem:[%s221 + $0x8] sm:$0xff] %vm251, %v250
      %s254 = smul.u32 2, %s15
      %p255 = scmp.lt.s32.totalorder %s254, 5
      %s256 = scalar_select %p255, %s254, 5
      %s257 = smul.addr %s256, 8
      %s258 = scalar_lea.vmem %s4, %s257
      // Predicated region
      $region37: #{parallel2d_block_forward.5} parent=35 // pred_check
        %p259 = pneg %p127
      $region38: #{parallel2d_block_forward.5} parent=35 // pred_check_branch
        %261 = sbr.rel (%p259) target = $region40
      $region39: #{parallel2d_block_forward.5} parent=35 // pred_region
        %s262 = smul.u32 2, %s15
      $region40: #{parallel2d_block_forward.5} parent=35 // pred_fallthru
        _
    $region36: #{parallel2d_block_forward.5} parent=5 // pred_fallthru
      _
    %p263 = scmp.le.s32.totalorder 2, %s10
    // Predicated region
    $region41: #{parallel2d_block_forward.5} parent=5 // pred_check
      %p264 = pneg %p263
    $region42: #{parallel2d_block_forward.5} parent=5 // pred_check_branch
      %266 = sbr.rel (%p264) target = $region44
    $region43: #{parallel2d_block_forward.5} parent=5 // pred_region
      %s267 = ssub.s32 %s10, 2
      // Predicated region
      $region45: #{parallel2d_block_forward.5} parent=43 // pred_check
        %p268 = pneg %p133
      $region46: #{parallel2d_block_forward.5} parent=43 // pred_check_branch
        %270 = sbr.rel (%p268) target = $region48
      $region47: #{parallel2d_block_forward.5} parent=43 // pred_region
        %s271 = smul.u32 2, %s16
        %p272 = scmp.lt.s32.totalorder %s271, 5
        %s273 = scalar_select %p272, %s271, 5
        %s274 = smul.addr %s273, 8
        %s275 = scalar_lea.vmem %s4, %s274
      $region48: #{parallel2d_block_forward.5} parent=43 // pred_fallthru
        _
    $region44: #{parallel2d_block_forward.5} parent=5 // pred_fallthru
      _
  $region6: #{parallel2d_block_forward.5} parent=0 // loop_footer
    %s14 = sadd.s32 1, %s10
  $region7: #{parallel2d_block_forward.5} parent=0 // loop_footer_branch
    %9 = sbr.rel target = $region3
  $region8: #{parallel2d_block_forward.5} parent=0 // loop_exit
    _

// kernel: parallel2d_block_forward.4
$region0: #{parallel2d_block_forward.4}
  #allocation0 [shape = 'u32[]', space=smem, size = 0x4, offset = 0x4, fixed_abs, tag = 'smem constant byte address 0x4 - core index']
  #allocation1 [shape = 'u32[144,128]{1,0:T(1,128)}', space=vmem, size = 0x12000, scoped, tag = 'internal scratch']
  %s0 = inlined_call_operand.vmem [shape: bf16[48,64], index: 0, kind: input, shape index: {}]
  %s1 = inlined_call_operand.vmem [shape: bf16[192,64], index: 1, kind: input, shape index: {}]
  %s2 = inlined_call_operand.vmem [shape: f32[1,64], index: 2, kind: input, shape index: {}]
  %s3 = inlined_call_operand.vmem [shape: f32[1,64], index: 3, kind: input, shape index: {}]
  %s4 = inlined_call_operand.vmem [shape: bf16[48,64], index: 4, kind: output, shape index: {0}]
  %s5 = inlined_call_operand.vmem [shape: f32[3,1,64], index: 5, kind: output, shape index: {1}]
  %s6 = inlined_call_operand.vmem [shape: f32[3,1,64], index: 6, kind: output, shape index: {2}]
  %7 = xla_tuple %s4, %s5, %s6
  %s8 = sld [smem:[#allocation0]]
  $region65: #{parallel2d_block_forward.4} parent=0
    _
  %s10 = ssub.s32 1, %s8
  %s11 = scalar_select 0, %s10, %s8
  loop: start=0, step=1, limit=5
  $region2: #{parallel2d_block_forward.4} parent=0 // loop_pre_header
    _
  $region3: #{parallel2d_block_forward.4} parent=0 // loop_header
    %s13 = sphi 0, %s17
    %p14 = scmp.ge.s32.totalorder %s13, 5
    %s23 = sphi 0, %s25
    %s26 = sphi 0, %s23
    %s27 = sphi 0, %s26
    %s43 = sphi 0, %s27
    %s47 = sphi 0, %s47
    %s49 = sphi 0, %s47
    %s50 = sphi 0, %s49
    %s64 = sphi 0, %s50
    %s68 = sphi 0, %s68
    %s70 = sphi 0, %s68
    %s71 = sphi 0, %s70
    %s85 = sphi 0, %s71
    %s89 = sphi 0, %s89
    %s91 = sphi 0, %s89
    %s92 = sphi 0, %s91
    %s106 = sphi 0, %s92
    %s112 = sphi 0, %s114
    %s115 = sphi 0, %s112
    %s116 = sphi 0, %s115
    %s132 = sphi 0, %s116
    %s138 = sphi 0, %s140
    %s141 = sphi 0, %s138
    %s142 = sphi 0, %s141
    %s158 = sphi 0, %s142
    %s164 = sphi 0, %s166
    %s167 = sphi 0, %s164
    %s168 = sphi 0, %s167
    %s184 = sphi 0, %s168
  $region4: #{parallel2d_block_forward.4} parent=0 // loop_header_branch
    %16 = sbr.rel (%p14) target = $region8
  $region5: #{parallel2d_block_forward.4} parent=0 // loop_body
    %s18 = ssub.s32 %s13, 1
    %s19 = ssub.s32 %s13, 2
    %s20 = sadd.s32 %s13, 1
    %s21 = ssub.s32 %s13, %s20
    %p22 = scmp.eq.s32.totalorder %s21, 0
    %s24 = sadd.s32 %s23, 1
    %s25 = scalar_select %p22, %s23, %s24
    %p28 = pneg %p22
    %p29 = scmp.eq.s32.totalorder %s13, 2
    %p30 = por %p28, %p29
    %p31 = scmp.ne.s32.totalorder %s23, %s26
    %p32 = scmp.eq.s32.totalorder %s13, 0
    %p33 = por %p31, %p32
    %p34 = scmp.ne.s32.totalorder %s23, %s26
    %p35 = scmp.eq.s32.totalorder %s18, 2
    %p36 = por %p34, %p35
    %p37 = scmp.ne.s32.totalorder %s26, %s27
    %p38 = scmp.eq.s32.totalorder %s18, 0
    %p39 = por %p37, %p38
    %p40 = scmp.ne.s32.totalorder %s26, %s27
    %p41 = scmp.eq.s32.totalorder %s19, 2
    %p42 = por %p40, %p41
    %p44 = scmp.ne.s32.totalorder %s27, %s43
    %p45 = scmp.eq.s32.totalorder %s19, 0
    %p46 = por %p44, %p45
    %s48 = sadd.s32 %s47, 1
    %p51 = scmp.eq.s32.totalorder %s13, 2
    %p52 = scmp.ne.s32.totalorder %s47, %s49
    %p53 = scmp.eq.s32.totalorder %s13, 0
    %p54 = por %p52, %p53
    %p55 = scmp.ne.s32.totalorder %s47, %s49
    %p56 = scmp.eq.s32.totalorder %s18, 2
    %p57 = por %p55, %p56
    %p58 = scmp.ne.s32.totalorder %s49, %s50
    %p59 = scmp.eq.s32.totalorder %s18, 0
    %p60 = por %p58, %p59
    %p61 = scmp.ne.s32.totalorder %s49, %s50
    %p62 = scmp.eq.s32.totalorder %s19, 2
    %p63 = por %p61, %p62
    %p65 = scmp.ne.s32.totalorder %s50, %s64
    %p66 = scmp.eq.s32.totalorder %s19, 0
    %p67 = por %p65, %p66
    %s69 = sadd.s32 %s68, 1
    %p72 = scmp.eq.s32.totalorder %s13, 2
    %p73 = scmp.ne.s32.totalorder %s68, %s70
    %p74 = scmp.eq.s32.totalorder %s13, 0
    %p75 = por %p73, %p74
    %p76 = scmp.ne.s32.totalorder %s68, %s70
    %p77 = scmp.eq.s32.totalorder %s18, 2
    %p78 = por %p76, %p77
    %p79 = scmp.ne.s32.totalorder %s70, %s71
    %p80 = scmp.eq.s32.totalorder %s18, 0
    %p81 = por %p79, %p80
    %p82 = scmp.ne.s32.totalorder %s70, %s71
    %p83 = scmp.eq.s32.totalorder %s19, 2
    %p84 = por %p82, %p83
    %p86 = scmp.ne.s32.totalorder %s71, %s85
    %p87 = scmp.eq.s32.totalorder %s19, 0
    %p88 = por %p86, %p87
    %s90 = sadd.s32 %s89, 1
    %p93 = scmp.eq.s32.totalorder %s13, 2
    %p94 = scmp.ne.s32.totalorder %s89, %s91
    %p95 = scmp.eq.s32.totalorder %s13, 0
    %p96 = por %p94, %p95
    %p97 = scmp.ne.s32.totalorder %s89, %s91
    %p98 = scmp.eq.s32.totalorder %s18, 2
    %p99 = por %p97, %p98
    %p100 = scmp.ne.s32.totalorder %s91, %s92
    %p101 = scmp.eq.s32.totalorder %s18, 0
    %p102 = por %p100, %p101
    %p103 = scmp.ne.s32.totalorder %s91, %s92
    %p104 = scmp.eq.s32.totalorder %s19, 2
    %p105 = por %p103, %p104
    %p107 = scmp.ne.s32.totalorder %s92, %s106
    %p108 = scmp.eq.s32.totalorder %s19, 0
    %p109 = por %p107, %p108
    %s110 = ssub.s32 %s13, %s20
    %p111 = scmp.eq.s32.totalorder %s110, 0
    %s113 = sadd.s32 %s112, 1
    %s114 = scalar_select %p111, %s112, %s113
    %p117 = pneg %p111
    %p118 = scmp.eq.s32.totalorder %s13, 2
    %p119 = por %p117, %p118
    %p120 = scmp.ne.s32.totalorder %s112, %s115
    %p121 = scmp.eq.s32.totalorder %s13, 0
    %p122 = por %p120, %p121
    %p123 = scmp.ne.s32.totalorder %s112, %s115
    %p124 = scmp.eq.s32.totalorder %s18, 2
    %p125 = por %p123, %p124
    %p126 = scmp.ne.s32.totalorder %s115, %s116
    %p127 = scmp.eq.s32.totalorder %s18, 0
    %p128 = por %p126, %p127
    %p129 = scmp.ne.s32.totalorder %s115, %s116
    %p130 = scmp.eq.s32.totalorder %s19, 2
    %p131 = por %p129, %p130
    %p133 = scmp.ne.s32.totalorder %s116, %s132
    %p134 = scmp.eq.s32.totalorder %s19, 0
    %p135 = por %p133, %p134
    %s136 = ssub.s32 %s13, %s20
    %p137 = scmp.eq.s32.totalorder %s136, 0
    %s139 = sadd.s32 %s138, 1
    %s140 = scalar_select %p137, %s138, %s139
    %p143 = pneg %p137
    %p144 = scmp.eq.s32.totalorder %s13, 2
    %p145 = por %p143, %p144
    %p146 = scmp.ne.s32.totalorder %s138, %s141
    %p147 = scmp.eq.s32.totalorder %s13, 0
    %p148 = por %p146, %p147
    %p149 = scmp.ne.s32.totalorder %s138, %s141
    %p150 = scmp.eq.s32.totalorder %s18, 2
    %p151 = por %p149, %p150
    %p152 = scmp.ne.s32.totalorder %s141, %s142
    %p153 = scmp.eq.s32.totalorder %s18, 0
    %p154 = por %p152, %p153
    %p155 = scmp.ne.s32.totalorder %s141, %s142
    %p156 = scmp.eq.s32.totalorder %s19, 2
    %p157 = por %p155, %p156
    %p159 = scmp.ne.s32.totalorder %s142, %s158
    %p160 = scmp.eq.s32.totalorder %s19, 0
    %p161 = por %p159, %p160
    %s162 = ssub.s32 %s13, %s20
    %p163 = scmp.eq.s32.totalorder %s162, 0
    %s165 = sadd.s32 %s164, 1
    %s166 = scalar_select %p163, %s164, %s165
    %p169 = pneg %p163
    %p170 = scmp.eq.s32.totalorder %s13, 2
    %p171 = por %p169, %p170
    %p172 = scmp.ne.s32.totalorder %s164, %s167
    %p173 = scmp.eq.s32.totalorder %s13, 0
    %p174 = por %p172, %p173
    %p175 = scmp.ne.s32.totalorder %s164, %s167
    %p176 = scmp.eq.s32.totalorder %s18, 2
    %p177 = por %p175, %p176
    %p178 = scmp.ne.s32.totalorder %s167, %s168
    %p179 = scmp.eq.s32.totalorder %s18, 0
    %p180 = por %p178, %p179
    %p181 = scmp.ne.s32.totalorder %s167, %s168
    %p182 = scmp.eq.s32.totalorder %s19, 2
    %p183 = por %p181, %p182
    %p185 = scmp.ne.s32.totalorder %s168, %s184
    %p186 = scmp.eq.s32.totalorder %s19, 0
    %p187 = por %p185, %p186
    %p188 = scmp.le.s32.totalorder 1, %s13
    %p189 = scmp.lt.s32.totalorder %s13, 4
    %p190 = pnand %p188, %p189
    %p191 = pneg %p190
    // Predicated region
    $region9: #{parallel2d_block_forward.4} parent=5 // pred_check
      _
    $region10: #{parallel2d_block_forward.4} parent=5 // pred_check_branch
      %193 = sbr.rel (%p190) target = $region12
    $region11: #{parallel2d_block_forward.4} parent=5 // pred_region
      %s194 = ssub.s32 %s13, 1
      // Predicated region
      $region13: #{parallel2d_block_forward.4} parent=11 // pred_check
        %p195 = pneg %p60
      $region14: #{parallel2d_block_forward.4} parent=11 // pred_check_branch
        %197 = sbr.rel (%p195) target = $region16
      $region15: #{parallel2d_block_forward.4} parent=11 // pred_region
        _
      $region16: #{parallel2d_block_forward.4} parent=11 // pred_fallthru
        _
      // Predicated region
      $region17: #{parallel2d_block_forward.4} parent=11 // pred_check
        %p198 = pneg %p81
      $region18: #{parallel2d_block_forward.4} parent=11 // pred_check_branch
        %200 = sbr.rel (%p198) target = $region20
      $region19: #{parallel2d_block_forward.4} parent=11 // pred_region
        _
      $region20: #{parallel2d_block_forward.4} parent=11 // pred_fallthru
        _
      // Predicated region
      $region21: #{parallel2d_block_forward.4} parent=11 // pred_check
        %p201 = pneg %p102
      $region22: #{parallel2d_block_forward.4} parent=11 // pred_check_branch
        %203 = sbr.rel (%p201) target = $region24
      $region23: #{parallel2d_block_forward.4} parent=11 // pred_region
        _
      $region24: #{parallel2d_block_forward.4} parent=11 // pred_fallthru
        _
    $region12: #{parallel2d_block_forward.4} parent=5 // pred_fallthru
      _
    %p204 = scmp.lt.s32.totalorder %s13, 3
    // Predicated region
    $region25: #{parallel2d_block_forward.4} parent=5 // pred_check
      %p205 = pneg %p204
    $region26: #{parallel2d_block_forward.4} parent=5 // pred_check_branch
      %207 = sbr.rel (%p205) target = $region28
    $region27: #{parallel2d_block_forward.4} parent=5 // pred_region
      // Predicated region
      $region29: #{parallel2d_block_forward.4} parent=27 // pred_check
        %p208 = pneg %p33
      $region30: #{parallel2d_block_forward.4} parent=27 // pred_check_branch
        %210 = sbr.rel (%p208) target = $region32
      $region31: #{parallel2d_block_forward.4} parent=27 // pred_region
        %s211 = smul.u32 2, %s13
        %p212 = scmp.lt.s32.totalorder %s211, 5
        %s213 = scalar_select %p212, %s211, 5
        %s214 = smul.addr %s213, 4
        %s215 = scalar_lea.vmem %s0, %s214
        %s216 = smul.u32 2, %s13
      $region32: #{parallel2d_block_forward.4} parent=27 // pred_fallthru
        _
    $region28: #{parallel2d_block_forward.4} parent=5 // pred_fallthru
      _
    %p217 = scmp.le.s32.totalorder 1, %s13
    %p218 = scmp.lt.s32.totalorder %s13, 4
    %p219 = pnand %p217, %p218
    %p220 = pneg %p219
    // Predicated region
    $region33: #{parallel2d_block_forward.4} parent=5 // pred_check
      _
    $region34: #{parallel2d_block_forward.4} parent=5 // pred_check_branch
      %222 = sbr.rel (%p219) target = $region36
    $region35: #{parallel2d_block_forward.4} parent=5 // pred_region
      %s223 = ssub.s32 %s13, 1
      %s224 = smul.u32 2, %s18
      %p225 = scmp.lt.s32.totalorder %s224, 5
      %s226 = scalar_select %p225, %s224, 5
      %s227 = smul.addr %s226, 4
      %s228 = scalar_lea.vmem %s0, %s227
      %p229 = pneg %p39
      %p230 = pneg %p36
      %p231 = pneg %p60
      %p232 = pneg %p57
      %p233 = pneg %p81
      %p234 = pneg %p78
      %p235 = pneg %p102
      %p236 = pneg %p99
      %p237 = pneg %p128
      %p238 = pneg %p125
      %s239 = smul.u32 2, %s18
      %p240 = scmp.lt.s32.totalorder %s239, 5
      %s241 = scalar_select %p240, %s239, 5
      %s242 = smul.addr %s241, 4
      %s243 = scalar_lea.vmem %s4, %s242
      %p244 = pneg %p154
      %p245 = pneg %p151
      %p246 = scmp.lt.s32.totalorder %s18, 2
      %s247 = scalar_select %p246, %s18, 2
      %s248 = scalar_lea.vmem %s5, %s247
      %p249 = pneg %p180
      %p250 = pneg %p177
      %p251 = scmp.lt.s32.totalorder %s18, 2
      %s252 = scalar_select %p251, %s18, 2
      %s253 = scalar_lea.vmem %s6, %s252
      %s254 = smul.u32 2, %s18
      %p255 = scmp.lt.s32.totalorder %s254, 5
      %s256 = scalar_select %p255, %s254, 5
      %s257 = smul.addr %s256, 4
      %s258 = scalar_lea.vmem %s0, %s257
      %s259 = smul.u32 2, %s18
      %s260 = smul.u32 2, %s18
      %p261 = scmp.lt.s32.totalorder %s260, 5
      %s262 = scalar_select %p261, %s260, 5
      %s263 = smul.addr %s262, 4
      %s264 = scalar_lea.vmem %s4, %s263
      %s265 = smul.u32 2, %s18
      %p266 = scmp.lt.s32.totalorder %s18, 2
      %s267 = scalar_select %p266, %s18, 2
      %s268 = scalar_lea.vmem %s5, %s267
      %p269 = scmp.lt.s32.totalorder %s18, 2
      %s270 = scalar_select %p269, %s18, 2
      %s271 = scalar_lea.vmem %s6, %s270
      %v273 = vld [vmem:[%s258] sm:$0xf]
      %v274 = vld [vmem:[%s258 + $0x4] sm:$0xf]
      %v275 = vunpack.c.l.bf16 %v273
      %v276 = vunpack.c.l.bf16 %v274
      %v277 = vld [vmem:[%s2] sm:$0x1]
      %v279 = vlaneseq
      %v280 = vshrl.u32 %v279, 7
      %v281 = vsub.s32 0, %v280
      %v282 = vrot.slane %v277, %v281
      %v284 = vmul.f32 %v275, %v282
      %v285 = vmul.f32 %v276, %v282
      %v286 = vld [vmem:[%s3] sm:$0x1]
      %v288 = vlaneseq
      %v289 = vshrl.u32 %v288, 7
      %v290 = vsub.s32 0, %v289
      %v291 = vrot.slane %v286, %v290
      %v293 = vadd.f32 %v284, %v291
      %v294 = vadd.f32 %v285, %v291
      %v295 = vmax.f32 %v293, 0.0
      %v296 = vmax.f32 %v294, 0.0
      %v297 = vlaneseq
      %v298 = vshrl.u32 %v297, 7
      %v299 = vadd.s32 %v298, 8
      %vm300 = vcmp.lt.s32.totalorder %v298, 0
      %v301 = vsub.s32 0, %v298
      %v302 = vsel %vm300, %v301, %v298
      %v303 = vshrl.u32 %v302, 3
      %v304 = vand.u32 %v302, 7
      %v305 = vsub.s32 0, %v304
      %v306 = vsel %vm300, %v305, %v304
      %vm307 = vcmp.lt.s32.totalorder %v299, 0
      %v308 = vsub.s32 0, %v299
      %v309 = vsel %vm307, %v308, %v299
      %v310 = vshrl.u32 %v309, 3
      %v311 = vand.u32 %v309, 7
      %v312 = vsub.s32 0, %v311
      %v313 = vsel %vm307, %v312, %v311
      %vm314 = vcmp.ne.s32.totalorder %v306, 0
      %vm315 = vcmp.ne.s32.totalorder %v313, 0
      %vm316 = vcmp.lt.s32.totalorder %v306, 0
      %vm317 = vcmp.lt.s32.totalorder %v313, 0
      %vm318 = vmand %vm316, %vm314
      %vm319 = vmand %vm317, %vm315
      %v320 = vadd.s32 %v306, 8
      %v321 = vadd.s32 %v313, 8
      %v322 = vsel %vm318, %v320, %v306
      %v323 = vsel %vm319, %v321, %v313
      %v324 = vrot.slane %v295, 7
      %v325 = vrot.slane %v296, 7
      %vm326 = vcmp.lt.s32.totalorder %v298, 1
      %v327 = vsel %vm326, %v324, %v325
      %v328 = vsel %vm326, %v325, %v324
      %v329 = vadd.s32 %v322, 4294967295
      %v330 = vadd.s32 %v323, 4294967295
      %vm331 = vcmp.ge.s32.totalorder %v329, 0
      %vm332 = vcmp.ge.s32.totalorder %v330, 0
      %vm333 = vcmp.lt.s32.totalorder %v329, 8
      %vm334 = vcmp.lt.s32.totalorder %v330, 8
      %vm335 = vmand %vm331, %vm333
      %vm336 = vmand %vm332, %vm334
      %v337 = vsel %vm335, %v328, 0.0
      %v338 = vsel %vm336, %v327, 0.0
      %v339 = vrot.slane %v295, 1
      %v340 = vrot.slane %v296, 1
      %vm341 = vcmp.lt.s32.totalorder %v298, 7
      %v342 = vsel %vm341, %v339, %v340
      %v343 = vsel %vm341, %v340, %v339
      %v344 = vadd.s32 %v322, 1
      %v345 = vadd.s32 %v323, 1
      %vm346 = vcmp.ge.s32.totalorder %v344, 0
      %vm347 = vcmp.ge.s32.totalorder %v345, 0
      %vm348 = vcmp.lt.s32.totalorder %v344, 8
      %vm349 = vcmp.lt.s32.totalorder %v345, 8
      %vm350 = vmand %vm346, %vm348
      %vm351 = vmand %vm347, %vm349
      %v352 = vsel %vm350, %v342, 0.0
      %v353 = vsel %vm351, %v343, 0.0
      %356 = vrot.lane.b32.xlu0 %v295, 64
      %v357 = vpop.permute.xlu0 %356
      %358 = vrot.lane.b32.xlu0 %v296, 64
      %v359 = vpop.permute.xlu0 %358
      %vm362 = vcmask 523264
      %v363 = vsel %vm362, %v337, %v357
      %v364 = vsel %vm362, %v338, %v359
      %v365 = vpack.c.bf16 %v364, %v363
      %v366 = vpack.c.bf16 %v353, %v352
      %v367 = vld [vmem:[%s1] sm:$0xf]
      %v368 = vld [vmem:[%s1 + $0x4] sm:$0xf]
      %v369 = vld [vmem:[%s1 + $0x8] sm:$0xf]
      %v370 = vld [vmem:[%s1 + $0xc] sm:$0xf]
      %v371 = vld [vmem:[%s1 + $0x10] sm:$0xf]
      %v372 = vld [vmem:[%s1 + $0x14] sm:$0xf]
      %v373 = vld [vmem:[%s1 + $0x18] sm:$0xf]
      %v374 = vld [vmem:[%s1 + $0x1c] sm:$0xf]
      %v375 = vld [vmem:[%s1 + $0x20] sm:$0xf]
      %v376 = vld [vmem:[%s1 + $0x24] sm:$0xf]
      %v377 = vld [vmem:[%s1 + $0x28] sm:$0xf]
      %v378 = vld [vmem:[%s1 + $0x2c] sm:$0xf]
      %v379 = vld [vmem:[%s1 + $0x30] sm:$0xf]
      %v380 = vld [vmem:[%s1 + $0x34] sm:$0xf]
      %v381 = vld [vmem:[%s1 + $0x38] sm:$0xf]
      %v382 = vld [vmem:[%s1 + $0x3c] sm:$0xf]
      %v383 = vld [vmem:[%s1 + $0x40] sm:$0xf]
      %v384 = vld [vmem:[%s1 + $0x44] sm:$0xf]
      %v385 = vld [vmem:[%s1 + $0x48] sm:$0xf]
      %v386 = vld [vmem:[%s1 + $0x4c] sm:$0xf]
      %v387 = vld [vmem:[%s1 + $0x50] sm:$0xf]
      %v388 = vld [vmem:[%s1 + $0x54] sm:$0xf]
      %v389 = vld [vmem:[%s1 + $0x58] sm:$0xf]
      %v390 = vld [vmem:[%s1 + $0x5c] sm:$0xf]
      %v415 = vunpack.c.l.b16 %v367
      %v416 = vunpack.c.l.b16 %v368
      %v417 = vunpack.c.l.b16 %v369
      %v418 = vunpack.c.l.b16 %v370
      %v419 = vunpack.c.l.b16 %v371
      %v420 = vunpack.c.l.b16 %v372
      %v421 = vunpack.c.l.b16 %v373
      %v422 = vunpack.c.l.b16 %v374
      %v423 = vunpack.c.l.b16 %v375
      %v424 = vunpack.c.l.b16 %v376
      %v425 = vunpack.c.l.b16 %v377
      %v426 = vunpack.c.l.b16 %v378
      %v427 = vunpack.c.l.b16 %v379
      %v428 = vunpack.c.l.b16 %v380
      %v429 = vunpack.c.l.b16 %v381
      %v430 = vunpack.c.l.b16 %v382
      %v431 = vunpack.c.l.b16 %v383
      %v432 = vunpack.c.l.b16 %v384
      %v433 = vunpack.c.l.b16 %v385
      %v434 = vunpack.c.l.b16 %v386
      %v435 = vunpack.c.l.b16 %v387
      %v436 = vunpack.c.l.b16 %v388
      %v437 = vunpack.c.l.b16 %v389
      %v438 = vunpack.c.l.b16 %v390
      %v439 = vpack.c.b16 %v416, %v415
      %v440 = vpack.c.b16 %v418, %v417
      %v441 = vpack.c.b16 %v420, %v419
      %v442 = vpack.c.b16 %v422, %v421
      %v443 = vpack.c.b16 %v424, %v423
      %v444 = vpack.c.b16 %v426, %v425
      %v445 = vpack.c.b16 %v428, %v427
      %v446 = vpack.c.b16 %v430, %v429
      %v447 = vpack.c.b16 %v432, %v431
      %v448 = vpack.c.b16 %v434, %v433
      %v449 = vpack.c.b16 %v436, %v435
      %v450 = vpack.c.b16 %v438, %v437
      %v464 = vsel %vm362, %v366, 0
      %466 = vmatprep.subr.bf16.mxu0 0
      %467 = vmatpush1.bf16.msra.mxu0 %v439
      %468 = vmatprep.subr.bf16.mxu0 0
      %469 = vmatpush1.bf16.msra.mxu0 %v440
      %470 = vmatprep.subr.bf16.mxu0 0
      %471 = vmatpush1.bf16.msra.mxu0 %v441
      %472 = vmatprep.subr.bf16.mxu0 0
      %473 = vmatpush1.bf16.msra.mxu0 %v442
      %474 = vmatprep.subr.bf16.mxu0 0
      %475 = vmatpush1.bf16.msra.mxu0 %v443
      %476 = vmatprep.subr.bf16.mxu0 0
      %477 = vmatpush1.bf16.msra.mxu0 %v444
      %478 = vmatprep.subr.bf16.mxu0 0
      %479 = vmatpush1.bf16.msra.mxu0 %v445
      %480 = vmatprep.subr.bf16.mxu0 0
      %481 = vmatpush1.bf16.msra.mxu0 %v446
      %482 = vmatprep.subr.bf16.mxu0 0
      %483 = vmatpush1.bf16.msra.mxu0 %v447
      %484 = vmatprep.subr.bf16.mxu0 0
      %485 = vmatpush1.bf16.msra.mxu0 %v448
      %486 = vmatprep.subr.bf16.mxu0 0
      %487 = vmatpush1.bf16.msra.mxu0 %v449
      %488 = vmatprep.subr.bf16.mxu0 0
      %489 = vmatpush1.bf16.msra.mxu0 %v450
      %490 = vmatprep.subr.bf16.mxu0 0
      %491 = vmatpush1.bf16.msra.mxu0 0
      %492 = vmatprep.subr.bf16.mxu0 0
      %493 = vmatpush1.bf16.msra.mxu0 0
      %494 = vmatprep.subr.bf16.mxu0 0
      %495 = vmatpush1.bf16.msra.mxu0 0
      %496 = vmatprep.subr.bf16.mxu0 0
      %497 = vmatpush1.bf16.msra.mxu0 0
      %498 = vmatprep.mubr.bf16.mxu0 %v464
      %499 = vmatmul.mubr.bf16.gmra.mrb[0].mxu0 %v365
      %v500 = vpop.f32.mrb[0].mxu0
      %v501 = vadd.f32 0.0, %v500
      %v502 = vpop.f32.mrb[0].mxu0
      %v503 = vpop.f32.mrb[0].mxu0
      %v504 = vadd.f32 0.0, %v503
      %v505 = vpop.f32.mrb[0].mxu0
      %506 = vdwg.mxu0
      %v507 = vpack.c.bf16 %v504, %v501
      %v509 = vunpack.c.l.b16 %v507
      %v510 = vunpack.c.h.b16 %v507
      %v511 = vpack.c.b16 %v509, %v509
      %v512 = vpack.c.b16 %v510, %v510
      %vm515 = vcmask 519168
      %516 = vst.msk [vmem:[%s264] sm:$0xf] %vm515, %v511
      %517 = vst.msk [vmem:[%s264 + $0x4] sm:$0xf] %vm515, %v512
      %v518 = vsel %vm362, %v501, 0.0
      %v519 = vsel %vm362, %v504, 0.0
      %v520 = vadd.f32 %v518, %v519
      %v521 = vrot.slane %v520, 4
      %v522 = vadd.f32 %v520, %v521
      %v523 = vrot.slane %v522, 2
      %v524 = vadd.f32 %v522, %v523
      %v525 = vrot.slane %v524, 1
      %v526 = vadd.f32 %v524, %v525
      %vm527 = vcmask 516096
      %528 = vst.msk [vmem:[%s268] sm:$0x1] %vm527, %v526
      %v529 = vmul.f32 %v501, %v501
      %v530 = vmul.f32 %v504, %v504
      %v531 = vsel %vm362, %v529, 0.0
      %v532 = vsel %vm362, %v530, 0.0
      %v533 = vadd.f32 %v531, %v532
      %v534 = vrot.slane %v533, 4
      %v535 = vadd.f32 %v533, %v534
      %v536 = vrot.slane %v535, 2
      %v537 = vadd.f32 %v535, %v536
      %v538 = vrot.slane %v537, 1
      %v539 = vadd.f32 %v537, %v538
      %540 = vst.msk [vmem:[%s271] sm:$0x1] %vm527, %v539
      %s541 = smul.u32 2, %s18
      %p542 = scmp.lt.s32.totalorder %s541, 5
      %s543 = scalar_select %p542, %s541, 5
      %s544 = smul.addr %s543, 4
      %s545 = scalar_lea.vmem %s4, %s544
      %p546 = scmp.lt.s32.totalorder %s18, 2
      %s547 = scalar_select %p546, %s18, 2
      %s548 = scalar_lea.vmem %s5, %s547
      %p549 = scmp.lt.s32.totalorder %s18, 2
      %s550 = scalar_select %p549, %s18, 2
      %s551 = scalar_lea.vmem %s6, %s550
      // Predicated region
      $region37: #{parallel2d_block_forward.4} parent=35 // pred_check
        %p552 = pneg %p125
      $region38: #{parallel2d_block_forward.4} parent=35 // pred_check_branch
        %554 = sbr.rel (%p552) target = $region40
      $region39: #{parallel2d_block_forward.4} parent=35 // pred_region
        %s555 = smul.u32 2, %s18
      $region40: #{parallel2d_block_forward.4} parent=35 // pred_fallthru
        _
      // Predicated region
      $region41: #{parallel2d_block_forward.4} parent=35 // pred_check
        %p556 = pneg %p151
      $region42: #{parallel2d_block_forward.4} parent=35 // pred_check_branch
        %558 = sbr.rel (%p556) target = $region44
      $region43: #{parallel2d_block_forward.4} parent=35 // pred_region
        _
      $region44: #{parallel2d_block_forward.4} parent=35 // pred_fallthru
        _
      // Predicated region
      $region45: #{parallel2d_block_forward.4} parent=35 // pred_check
        %p559 = pneg %p177
      $region46: #{parallel2d_block_forward.4} parent=35 // pred_check_branch
        %561 = sbr.rel (%p559) target = $region48
      $region47: #{parallel2d_block_forward.4} parent=35 // pred_region
        _
      $region48: #{parallel2d_block_forward.4} parent=35 // pred_fallthru
        _
    $region36: #{parallel2d_block_forward.4} parent=5 // pred_fallthru
      _
    %p562 = scmp.le.s32.totalorder 2, %s13
    // Predicated region
    $region49: #{parallel2d_block_forward.4} parent=5 // pred_check
      %p563 = pneg %p562
    $region50: #{parallel2d_block_forward.4} parent=5 // pred_check_branch
      %565 = sbr.rel (%p563) target = $region52
    $region51: #{parallel2d_block_forward.4} parent=5 // pred_region
      %s566 = ssub.s32 %s13, 2
      // Predicated region
      $region53: #{parallel2d_block_forward.4} parent=51 // pred_check
        %p567 = pneg %p131
      $region54: #{parallel2d_block_forward.4} parent=51 // pred_check_branch
        %569 = sbr.rel (%p567) target = $region56
      $region55: #{parallel2d_block_forward.4} parent=51 // pred_region
        %s570 = smul.u32 2, %s19
        %p571 = scmp.lt.s32.totalorder %s570, 5
        %s572 = scalar_select %p571, %s570, 5
        %s573 = smul.addr %s572, 4
        %s574 = scalar_lea.vmem %s4, %s573
      $region56: #{parallel2d_block_forward.4} parent=51 // pred_fallthru
        _
      // Predicated region
      $region57: #{parallel2d_block_forward.4} parent=51 // pred_check
        %p575 = pneg %p157
      $region58: #{parallel2d_block_forward.4} parent=51 // pred_check_branch
        %577 = sbr.rel (%p575) target = $region60
      $region59: #{parallel2d_block_forward.4} parent=51 // pred_region
        %p578 = scmp.lt.s32.totalorder %s19, 2
        %s579 = scalar_select %p578, %s19, 2
        %s580 = scalar_lea.vmem %s5, %s579
      $region60: #{parallel2d_block_forward.4} parent=51 // pred_fallthru
        _
      // Predicated region
      $region61: #{parallel2d_block_forward.4} parent=51 // pred_check
        %p581 = pneg %p183
      $region62: #{parallel2d_block_forward.4} parent=51 // pred_check_branch
        %583 = sbr.rel (%p581) target = $region64
      $region63: #{parallel2d_block_forward.4} parent=51 // pred_region
        %p584 = scmp.lt.s32.totalorder %s19, 2
        %s585 = scalar_select %p584, %s19, 2
        %s586 = scalar_lea.vmem %s6, %s585
      $region64: #{parallel2d_block_forward.4} parent=51 // pred_fallthru
        _
    $region52: #{parallel2d_block_forward.4} parent=5 // pred_fallthru
      _
  $region6: #{parallel2d_block_forward.4} parent=0 // loop_footer
    %s17 = sadd.s32 1, %s13
  $region7: #{parallel2d_block_forward.4} parent=0 // loop_footer_branch
    %12 = sbr.rel target = $region3
  $region8: #{parallel2d_block_forward.4} parent=0 // loop_exit
    _

</llo_original>
